<compile_context>
chip_gen: v5e
topology: v5e:2x2
jax: 0.10.0
libtpu: 0.0.40
codegen_flags: <defaults>
</compile_context>

<pallas_src>
import math

import jax
import jax.numpy as jnp
from jax.experimental import pallas as pl
from jax.experimental.pallas import tpu as pltpu

# ---------------- model hyper-params (consistent with the module) -----------
B = 2              # batch per window (as in the PyTorch forward)
C_IN = 4           # in_features
L = 24             # window_size
C1 = 64
C2 = 128
K = 3
H1 = 64            # linear1 out
L1 = L - (K - 1)   # 22  (after conv1)
LP1 = L1 - 2       # 20  (after pool1)
L2 = LP1 - (K - 1) # 18  (after conv2)
LP2 = L2 - 2       # 16  (after pool2)
FLAT = C2 * LP2    # 2048


def _cnn_kernel(x_ref, w1_ref, b1_ref, w2_ref, b2_ref,
                wl1_ref, bl1_ref, wl2_ref, bl2_ref, out_ref):
    """One grid step = full forward pass for one window (batch B).

    x_ref:   (1, B, L, C_IN)  per-window activations, channels on lanes
    w1_ref:  (K*C_IN, C1) f32  conv1 weight as im2col matrix (row = k*C_IN+i)
    b1_ref:  (1, C1) f32
    w2_ref:  (K*C1, C2) bf16   conv2 weight as im2col matrix (row = k*C1+c)
    b2_ref:  (1, C2) f32
    wl1_ref: (FLAT, H1) bf16   linear1 weight, rows permuted to t-major flatten
    bl1_ref: (1, H1) f32
    wl2_ref: (1, H1) f32       linear2 weight as a lane row
    bl2_ref: (1, 1) f32
    out_ref: (1, B, 1) f32
    """
    x = x_ref[0]                                   # (B, L, C_IN)
    x_full = x.reshape(B * L, C_IN)                # (B*L, 4), row = b*L + t

    # ---- conv1 im2col (batch-fused): 3 sublane shifts + 1 lane concat, then
    #      drop the (K-1) cross-batch rows at each batch boundary. ----
    x_big = jnp.concatenate(
        [x_full[k:k + B * L - (K - 1), :] for k in range(K)], axis=-1)   # (46, 12)
    x_col = jnp.concatenate(
        [x_big[b * L:b * L + L1, :] for b in range(B)], axis=0)          # (B*L1, 12)

    y1 = jnp.maximum(
        jnp.dot(x_col, w1_ref[...], preferred_element_type=jnp.float32)
        + b1_ref[...], 0.0)                        # (B*L1, 64), row = b*L1 + t

    # ---- MaxPool1d(3,1) over length (batch-fused) ----
    pool1 = jnp.maximum(jnp.maximum(y1[0:B * L1 - 2, :], y1[1:B * L1 - 1, :]),
                        y1[2:B * L1, :])                                  # (42, 64)
    p1 = jnp.concatenate(
        [pool1[b * L1:b * L1 + LP1, :] for b in range(B)], axis=0)        # (B*LP1, 64)

    # ---- conv2 im2col (batch-fused) ----
    p1_big = jnp.concatenate(
        [p1[k:k + B * LP1 - (K - 1), :] for k in range(K)], axis=-1)      # (38, 192)
    p1_col = jnp.concatenate(
        [p1_big[b * LP1:b * LP1 + L2, :] for b in range(B)], axis=0)      # (B*L2, 192)

    # ---- conv2: single (36, 192) @ (192, 128) bf16 matmul, f32 accumulate ----
    y2 = jnp.maximum(
        jnp.dot(p1_col.astype(jnp.bfloat16), w2_ref[...],
                preferred_element_type=jnp.float32) + b2_ref[...], 0.0)   # (36, 128)

    # ---- MaxPool1d(3,1) + flatten (batch-fused, single reshape) ----
    pool2 = jnp.maximum(jnp.maximum(y2[0:B * L2 - 2, :], y2[1:B * L2 - 1, :]),
                        y2[2:B * L2, :])                                   # (34, 128)
    p2 = jnp.concatenate(
        [pool2[b * L2:b * L2 + LP2, :] for b in range(B)], axis=0)         # (32, 128)
    flat = p2.reshape(B, FLAT)                                             # (B, 2048)

    # ---- linear1 + ReLU: single (B, 2048) @ (2048, 64) bf16 matmul ----
    h = jnp.maximum(
        jnp.dot(flat.astype(jnp.bfloat16), wl1_ref[...],
                preferred_element_type=jnp.float32) + bl1_ref[...], 0.0)   # (B, 64)

    # ---- linear2 on VPU/XLU: mul + lane reduce (no 1-lane MXU matmul) ----
    out_ref[0] = (jnp.sum(h * wl2_ref[...], axis=-1, keepdims=True)
                  + bl2_ref[...])                                          # (B, 1)


def prepare_params(params):
    """One-time weight re-layout for the kernel (cache & reuse across calls)."""
    w1, b1, w2, b2, wl1, bl1, wl2, bl2 = params
    # conv weights -> im2col matrices, channels-out on lanes.
    w1m = jnp.transpose(w1, (2, 1, 0)).reshape(K * C_IN, C1)               # f32, tiny
    w2m = jnp.transpose(w2, (2, 1, 0)).reshape(K * C1, C2).astype(jnp.bfloat16)
    b1r = b1.reshape(1, C1)
    b2r = b2.reshape(1, C2)
    # Kernel flattens pooled output t-major (t*128 + c); torch.flatten is
    # channel-major (c*16 + t) -> permute wl1's columns into matching rows.
    wl1t = jnp.transpose(wl1.reshape(H1, C2, LP2),
                         (2, 1, 0)).reshape(FLAT, H1).astype(jnp.bfloat16)
    bl1r = bl1.reshape(1, H1)
    wl2r = wl2.reshape(1, H1)
    bl2r = bl2.reshape(1, 1)
    return (w1m, b1r, w2m, b2r, wl1t, bl1r, wl2r, bl2r)


@jax.jit
def cnn_forward(x, prep):
    """x: (N, B, L, C_IN) float32 — N sliding windows per call, channels last.

    Weights stay VMEM-resident across the whole grid (constant index_maps);
    only the per-window x / out blocks pipeline.
    """
    n = x.shape[0]
    w1m, b1r, w2m, b2r, wl1t, bl1r, wl2r, bl2r = prep

    def pinned(shape):
        # Full-array block, constant block index -> DMA'd once, resident after.
        return pl.BlockSpec(shape, lambda i: (0, 0))

    return pl.pallas_call(
        _cnn_kernel,
        out_shape=jax.ShapeDtypeStruct((n, B, 1), jnp.float32),
        grid=(n,),
        in_specs=[
            pl.BlockSpec((1, B, L, C_IN), lambda i: (i, 0, 0, 0)),  # x: pipelined
            pinned((K * C_IN, C1)),    # w1m
            pinned((1, C1)),           # b1
            pinned((K * C1, C2)),      # w2m (bf16)
            pinned((1, C2)),           # b2
            pinned((FLAT, H1)),        # wl1t (bf16)
            pinned((1, H1)),           # bl1
            pinned((1, H1)),           # wl2
            pinned((1, 1)),            # bl2
        ],
        out_specs=pl.BlockSpec((1, B, 1), lambda i: (i, 0, 0)),
        compiler_params=pltpu.CompilerParams(
            dimension_semantics=("parallel",)),   # v7x: shard windows over 2 TCs
    )(x, w1m, b1r, w2m, b2r, wl1t, bl1r, wl2r, bl2r)


def _init_params(key):
    """Deterministic PyTorch-style uniform init (same shapes as the module)."""
    ks = jax.random.split(key, 8)

    def u(k, shape, fan_in):
        bound = 1.0 / math.sqrt(fan_in)
        return jax.random.uniform(k, shape, jnp.float32, -bound, bound)

    w1 = u(ks[0], (C1, C_IN, K), C_IN * K)
    b1 = u(ks[1], (C1,), C_IN * K)
    w2 = u(ks[2], (C2, C1, K), C1 * K)
    b2 = u(ks[3], (C2,), C1 * K)
    wl1 = u(ks[4], (H1, FLAT), FLAT)
    bl1 = u(ks[5], (H1,), FLAT)
    wl2 = u(ks[6], (1, H1), H1)
    bl2 = u(ks[7], (1,), H1)
    return (w1, b1, w2, b2, wl1, bl1, wl2, bl2)


def _reference(x, params):
    """Pure-JAX f32 reference mirroring the PyTorch forward exactly.

    x: (B, C_IN, L) — the PyTorch layout.
    """
    (w1, b1, w2, b2, wl1, bl1, wl2, bl2) = params

    def conv1d(x, w, b):
        lout = x.shape[-1] - (w.shape[-1] - 1)
        y = sum(jnp.einsum('oi,bil->bol', w[:, :, k], x[:, :, k:k + lout])
                for k in range(w.shape[-1]))
        return y + b[None, :, None]

    def maxpool3(x):
        lout = x.shape[-1] - 2
        return jnp.maximum(jnp.maximum(x[..., 0:lout], x[..., 1:1 + lout]),
                           x[..., 2:2 + lout])

    h = maxpool3(jax.nn.relu(conv1d(x, w1, b1)))
    h = maxpool3(jax.nn.relu(conv1d(h, w2, b2)))
    h = h.reshape(h.shape[0], -1)
    h = jax.nn.relu(h @ wl1.T + bl1)
    return h @ wl2.T + bl2


if __name__ == "__main__":
    N = 8  # number of sliding windows batched per pallas_call
    key = jax.random.PRNGKey(0)
    kx, kp = jax.random.split(key)

    # PyTorch-layout input per window: (N, B, C_IN, L)
    x_torch = jax.random.normal(kx, (N, B, C_IN, L), jnp.float32)
    params = _init_params(kp)

    prep = prepare_params(params)                   # one-time weight re-layout
    # Window extraction should emit channels-last; done once outside the
    # jitted inference path here.
    x_nlc = jnp.transpose(x_torch, (0, 1, 3, 2))    # (N, B, L, C_IN)

    out = jax.block_until_ready(cnn_forward(x_nlc, prep))
    ref = jax.block_until_ready(
        jnp.stack([_reference(x_torch[i], params) for i in range(N)], axis=0))

    assert out.shape == (N, B, 1), out.shape
    # conv2 / linear1 use bf16 weights with f32 accumulation -> small tolerance.
    assert jnp.allclose(out, ref, atol=2e-2, rtol=2e-2), (out, ref)
    print("KERNEL_OK")
</pallas_src>

<mosaic_0001>
module attributes {stable_mosaic.version = 11 : i64} {
  func.func @_cnn_kernel(%arg0: i32, %arg1: memref<1x2x24x4xf32, #tpu.memory_space<vmem>>, %arg2: memref<12x64xf32, #tpu.memory_space<vmem>>, %arg3: memref<1x64xf32, #tpu.memory_space<vmem>>, %arg4: memref<192x128xbf16, #tpu.memory_space<vmem>>, %arg5: memref<1x128xf32, #tpu.memory_space<vmem>>, %arg6: memref<2048x64xbf16, #tpu.memory_space<vmem>>, %arg7: memref<1x64xf32, #tpu.memory_space<vmem>>, %arg8: memref<1x64xf32, #tpu.memory_space<vmem>>, %arg9: memref<1x1xf32, #tpu.memory_space<vmem>>, %arg10: memref<1x2x1xf32, #tpu.memory_space<vmem>>) attributes {dimension_semantics = [#tpu.dimension_semantics<parallel>], iteration_bounds = array<i64: 8>, scalar_prefetch = 0 : i64, scratch_operands = 0 : i64, tpu.core_type = #tpu.core_type<tc>, window_params = [{transform_indices = @transform_0, window_bounds = array<i64: 1, 2, 24, 4>}, {pipeline_mode = #tpu.pipeline_mode<synchronous>, transform_indices = @transform_1, window_bounds = array<i64: 12, 64>}, {pipeline_mode = #tpu.pipeline_mode<synchronous>, transform_indices = @transform_2, window_bounds = array<i64: 1, 64>}, {pipeline_mode = #tpu.pipeline_mode<synchronous>, transform_indices = @transform_3, window_bounds = array<i64: 192, 128>}, {pipeline_mode = #tpu.pipeline_mode<synchronous>, transform_indices = @transform_4, window_bounds = array<i64: 1, 128>}, {pipeline_mode = #tpu.pipeline_mode<synchronous>, transform_indices = @transform_5, window_bounds = array<i64: 2048, 64>}, {pipeline_mode = #tpu.pipeline_mode<synchronous>, transform_indices = @transform_6, window_bounds = array<i64: 1, 64>}, {pipeline_mode = #tpu.pipeline_mode<synchronous>, transform_indices = @transform_7, window_bounds = array<i64: 1, 64>}, {pipeline_mode = #tpu.pipeline_mode<synchronous>, transform_indices = @transform_8, window_bounds = array<i64: 1, 1>}, {transform_indices = @transform_9, window_bounds = array<i64: 1, 2, 1>}]} {
    %c0 = arith.constant 0 : index
    %c0_0 = arith.constant 0 : index
    %c0_1 = arith.constant 0 : index
    %c0_2 = arith.constant 0 : index
    %0 = vector.load %arg1[%c0, %c0_0, %c0_1, %c0_2] : memref<1x2x24x4xf32, #tpu.memory_space<vmem>>, vector<1x2x24x4xf32>
    %1 = vector.shape_cast %0 : vector<1x2x24x4xf32> to vector<2x24x4xf32>
    %2 = vector.shape_cast %1 : vector<2x24x4xf32> to vector<48x4xf32>
    %3 = vector.extract_strided_slice %2 {offsets = [0, 0], sizes = [46, 4], strides = [1, 1]} : vector<48x4xf32> to vector<46x4xf32>
    %4 = vector.extract_strided_slice %2 {offsets = [1, 0], sizes = [46, 4], strides = [1, 1]} : vector<48x4xf32> to vector<46x4xf32>
    %5 = vector.extract_strided_slice %2 {offsets = [2, 0], sizes = [46, 4], strides = [1, 1]} : vector<48x4xf32> to vector<46x4xf32>
    %6 = tpu.concatenate %3, %4, %5 in 1 : vector<46x4xf32>, vector<46x4xf32>, vector<46x4xf32> -> vector<46x12xf32>
    %7 = vector.extract_strided_slice %6 {offsets = [0, 0], sizes = [22, 12], strides = [1, 1]} : vector<46x12xf32> to vector<22x12xf32>
    %8 = vector.extract_strided_slice %6 {offsets = [24, 0], sizes = [22, 12], strides = [1, 1]} : vector<46x12xf32> to vector<22x12xf32>
    %9 = tpu.concatenate %7, %8 in 0 : vector<22x12xf32>, vector<22x12xf32> -> vector<44x12xf32>
    %c0_3 = arith.constant 0 : index
    %c0_4 = arith.constant 0 : index
    %10 = vector.load %arg2[%c0_3, %c0_4] : memref<12x64xf32, #tpu.memory_space<vmem>>, vector<12x64xf32>
    %cst = arith.constant dense<0.000000e+00> : vector<44x64xf32>
    %11 = tpu.matmul %9, %10, %cst {dimension_numbers = #tpu.dot_dimension_numbers<[1], [0], [0], [1], [0, 0, 1, 1], [], []>} : vector<44x12xf32>, vector<12x64xf32>, vector<44x64xf32> -> vector<44x64xf32>
    %c0_5 = arith.constant 0 : index
    %c0_6 = arith.constant 0 : index
    %12 = vector.load %arg3[%c0_5, %c0_6] : memref<1x64xf32, #tpu.memory_space<vmem>>, vector<1x64xf32>
    %13 = vector.broadcast %12 : vector<1x64xf32> to vector<44x64xf32>
    %14 = arith.addf %11, %13 : vector<44x64xf32>
    %cst_7 = arith.constant 0.000000e+00 : f32
    %15 = vector.broadcast %cst_7 : f32 to vector<44x64xf32>
    %16 = arith.maximumf %14, %15 : vector<44x64xf32>
    %17 = vector.extract_strided_slice %16 {offsets = [0, 0], sizes = [42, 64], strides = [1, 1]} : vector<44x64xf32> to vector<42x64xf32>
    %18 = vector.extract_strided_slice %16 {offsets = [1, 0], sizes = [42, 64], strides = [1, 1]} : vector<44x64xf32> to vector<42x64xf32>
    %19 = arith.maximumf %17, %18 : vector<42x64xf32>
    %20 = vector.extract_strided_slice %16 {offsets = [2, 0], sizes = [42, 64], strides = [1, 1]} : vector<44x64xf32> to vector<42x64xf32>
    %21 = arith.maximumf %19, %20 : vector<42x64xf32>
    %22 = vector.extract_strided_slice %21 {offsets = [0, 0], sizes = [20, 64], strides = [1, 1]} : vector<42x64xf32> to vector<20x64xf32>
    %23 = vector.extract_strided_slice %21 {offsets = [22, 0], sizes = [20, 64], strides = [1, 1]} : vector<42x64xf32> to vector<20x64xf32>
    %24 = tpu.concatenate %22, %23 in 0 : vector<20x64xf32>, vector<20x64xf32> -> vector<40x64xf32>
    %25 = vector.extract_strided_slice %24 {offsets = [0, 0], sizes = [38, 64], strides = [1, 1]} : vector<40x64xf32> to vector<38x64xf32>
    %26 = vector.extract_strided_slice %24 {offsets = [1, 0], sizes = [38, 64], strides = [1, 1]} : vector<40x64xf32> to vector<38x64xf32>
    %27 = vector.extract_strided_slice %24 {offsets = [2, 0], sizes = [38, 64], strides = [1, 1]} : vector<40x64xf32> to vector<38x64xf32>
    %28 = tpu.concatenate %25, %26, %27 in 1 : vector<38x64xf32>, vector<38x64xf32>, vector<38x64xf32> -> vector<38x192xf32>
    %29 = vector.extract_strided_slice %28 {offsets = [0, 0], sizes = [18, 192], strides = [1, 1]} : vector<38x192xf32> to vector<18x192xf32>
    %30 = vector.extract_strided_slice %28 {offsets = [20, 0], sizes = [18, 192], strides = [1, 1]} : vector<38x192xf32> to vector<18x192xf32>
    %31 = tpu.concatenate %29, %30 in 0 : vector<18x192xf32>, vector<18x192xf32> -> vector<36x192xf32>
    %32 = arith.truncf %31 : vector<36x192xf32> to vector<36x192xbf16>
    %c0_8 = arith.constant 0 : index
    %c0_9 = arith.constant 0 : index
    %33 = vector.load %arg4[%c0_8, %c0_9] : memref<192x128xbf16, #tpu.memory_space<vmem>>, vector<192x128xbf16>
    %cst_10 = arith.constant dense<0.000000e+00> : vector<36x128xf32>
    %34 = tpu.matmul %32, %33, %cst_10 {dimension_numbers = #tpu.dot_dimension_numbers<[1], [0], [0], [1], [0, 0, 1, 1], [], []>} : vector<36x192xbf16>, vector<192x128xbf16>, vector<36x128xf32> -> vector<36x128xf32>
    %c0_11 = arith.constant 0 : index
    %c0_12 = arith.constant 0 : index
    %35 = vector.load %arg5[%c0_11, %c0_12] : memref<1x128xf32, #tpu.memory_space<vmem>>, vector<1x128xf32>
    %36 = vector.broadcast %35 : vector<1x128xf32> to vector<36x128xf32>
    %37 = arith.addf %34, %36 : vector<36x128xf32>
    %cst_13 = arith.constant 0.000000e+00 : f32
    %38 = vector.broadcast %cst_13 : f32 to vector<36x128xf32>
    %39 = arith.maximumf %37, %38 : vector<36x128xf32>
    %40 = vector.extract_strided_slice %39 {offsets = [0, 0], sizes = [34, 128], strides = [1, 1]} : vector<36x128xf32> to vector<34x128xf32>
    %41 = vector.extract_strided_slice %39 {offsets = [1, 0], sizes = [34, 128], strides = [1, 1]} : vector<36x128xf32> to vector<34x128xf32>
    %42 = arith.maximumf %40, %41 : vector<34x128xf32>
    %43 = vector.extract_strided_slice %39 {offsets = [2, 0], sizes = [34, 128], strides = [1, 1]} : vector<36x128xf32> to vector<34x128xf32>
    %44 = arith.maximumf %42, %43 : vector<34x128xf32>
    %45 = vector.extract_strided_slice %44 {offsets = [0, 0], sizes = [16, 128], strides = [1, 1]} : vector<34x128xf32> to vector<16x128xf32>
    %46 = vector.extract_strided_slice %44 {offsets = [18, 0], sizes = [16, 128], strides = [1, 1]} : vector<34x128xf32> to vector<16x128xf32>
    %47 = tpu.concatenate %45, %46 in 0 : vector<16x128xf32>, vector<16x128xf32> -> vector<32x128xf32>
    %48 = vector.shape_cast %47 : vector<32x128xf32> to vector<2x2048xf32>
    %49 = arith.truncf %48 : vector<2x2048xf32> to vector<2x2048xbf16>
    %c0_14 = arith.constant 0 : index
    %c0_15 = arith.constant 0 : index
    %50 = vector.load %arg6[%c0_14, %c0_15] : memref<2048x64xbf16, #tpu.memory_space<vmem>>, vector<2048x64xbf16>
    %cst_16 = arith.constant dense<0.000000e+00> : vector<2x64xf32>
    %51 = tpu.matmul %49, %50, %cst_16 {dimension_numbers = #tpu.dot_dimension_numbers<[1], [0], [0], [1], [0, 0, 1, 1], [], []>} : vector<2x2048xbf16>, vector<2048x64xbf16>, vector<2x64xf32> -> vector<2x64xf32>
    %c0_17 = arith.constant 0 : index
    %c0_18 = arith.constant 0 : index
    %52 = vector.load %arg7[%c0_17, %c0_18] : memref<1x64xf32, #tpu.memory_space<vmem>>, vector<1x64xf32>
    %53 = vector.broadcast %52 : vector<1x64xf32> to vector<2x64xf32>
    %54 = arith.addf %51, %53 : vector<2x64xf32>
    %cst_19 = arith.constant 0.000000e+00 : f32
    %55 = vector.broadcast %cst_19 : f32 to vector<2x64xf32>
    %56 = arith.maximumf %54, %55 : vector<2x64xf32>
    %c0_20 = arith.constant 0 : index
    %c0_21 = arith.constant 0 : index
    %57 = vector.load %arg8[%c0_20, %c0_21] : memref<1x64xf32, #tpu.memory_space<vmem>>, vector<1x64xf32>
    %58 = vector.broadcast %57 : vector<1x64xf32> to vector<2x64xf32>
    %59 = arith.mulf %56, %58 : vector<2x64xf32>
    %cst_22 = arith.constant dense<0.000000e+00> : vector<2xf32>
    %60 = vector.multi_reduction <add>, %59, %cst_22 [1] : vector<2x64xf32> to vector<2xf32>
    %61 = vector.shape_cast %60 : vector<2xf32> to vector<2x1xf32>
    %c0_23 = arith.constant 0 : index
    %c0_24 = arith.constant 0 : index
    %62 = vector.load %arg9[%c0_23, %c0_24] : memref<1x1xf32, #tpu.memory_space<vmem>>, vector<1x1xf32>
    %63 = vector.broadcast %62 : vector<1x1xf32> to vector<2x1xf32>
    %64 = arith.addf %61, %63 : vector<2x1xf32>
    %c0_25 = arith.constant 0 : index
    %c0_26 = arith.constant 0 : index
    %c0_27 = arith.constant 0 : index
    %65 = vector.load %arg10[%c0_25, %c0_26, %c0_27] : memref<1x2x1xf32, #tpu.memory_space<vmem>>, vector<1x2x1xf32>
    %66 = vector.shape_cast %65 : vector<1x2x1xf32> to vector<2x1xf32>
    %67 = vector.shape_cast %64 : vector<2x1xf32> to vector<1x2x1xf32>
    tpu.vector_store %arg10[%c0_25, %c0_26, %c0_27], %67 {strides = array<i32>} : memref<1x2x1xf32, #tpu.memory_space<vmem>>, vector<1x2x1xf32>,
    return
  }
  func.func @transform_0(%arg0: i32) -> (i32, i32, i32, i32) {
    %c0_i32 = arith.constant 0 : i32
    %c0_i32_0 = arith.constant 0 : i32
    %c0_i32_1 = arith.constant 0 : i32
    %c0_i32_2 = arith.constant 0 : i32
    return %arg0, %c0_i32, %c0_i32_0, %c0_i32_1 : i32, i32, i32, i32
  }
  func.func @transform_1(%arg0: i32) -> (i32, i32) {
    %c0_i32 = arith.constant 0 : i32
    %c0_i32_0 = arith.constant 0 : i32
    %c0_i32_1 = arith.constant 0 : i32
    return %c0_i32, %c0_i32_0 : i32, i32
  }
  func.func @transform_2(%arg0: i32) -> (i32, i32) {
    %c0_i32 = arith.constant 0 : i32
    %c0_i32_0 = arith.constant 0 : i32
    %c0_i32_1 = arith.constant 0 : i32
    return %c0_i32, %c0_i32_0 : i32, i32
  }
  func.func @transform_3(%arg0: i32) -> (i32, i32) {
    %c0_i32 = arith.constant 0 : i32
    %c0_i32_0 = arith.constant 0 : i32
    %c0_i32_1 = arith.constant 0 : i32
    return %c0_i32, %c0_i32_0 : i32, i32
  }
  func.func @transform_4(%arg0: i32) -> (i32, i32) {
    %c0_i32 = arith.constant 0 : i32
    %c0_i32_0 = arith.constant 0 : i32
    %c0_i32_1 = arith.constant 0 : i32
    return %c0_i32, %c0_i32_0 : i32, i32
  }
  func.func @transform_5(%arg0: i32) -> (i32, i32) {
    %c0_i32 = arith.constant 0 : i32
    %c0_i32_0 = arith.constant 0 : i32
    %c0_i32_1 = arith.constant 0 : i32
    return %c0_i32, %c0_i32_0 : i32, i32
  }
  func.func @transform_6(%arg0: i32) -> (i32, i32) {
    %c0_i32 = arith.constant 0 : i32
    %c0_i32_0 = arith.constant 0 : i32
    %c0_i32_1 = arith.constant 0 : i32
    return %c0_i32, %c0_i32_0 : i32, i32
  }
  func.func @transform_7(%arg0: i32) -> (i32, i32) {
    %c0_i32 = arith.constant 0 : i32
    %c0_i32_0 = arith.constant 0 : i32
    %c0_i32_1 = arith.constant 0 : i32
    return %c0_i32, %c0_i32_0 : i32, i32
  }
  func.func @transform_8(%arg0: i32) -> (i32, i32) {
    %c0_i32 = arith.constant 0 : i32
    %c0_i32_0 = arith.constant 0 : i32
    %c0_i32_1 = arith.constant 0 : i32
    return %c0_i32, %c0_i32_0 : i32, i32
  }
  func.func @transform_9(%arg0: i32) -> (i32, i32, i32) {
    %c0_i32 = arith.constant 0 : i32
    %c0_i32_0 = arith.constant 0 : i32
    %c0_i32_1 = arith.constant 0 : i32
    return %arg0, %c0_i32, %c0_i32_0 : i32, i32, i32
  }
}

</mosaic_0001>

<llo_original>
// kernel: cnn_forward.1
$region0: #{cnn_forward.1}
  #allocation0 [shape = 'u32[]', space=smem, size = 0x4, offset = 0x4, fixed_abs, tag = 'smem constant byte address 0x4 - core index']
  #allocation1 [shape = 'u32[72,128]{1,0:T(1,128)}', space=vmem, size = 0x9000, scoped, tag = 'internal scratch']
  #allocation2 [shape = 'f32[1,1]{1,0:T(1,128)S(1)}', space=vmem, size = 0x200, scoped, tag = 'scoped memory for cnn_forward.1']
  %s0 = inlined_call_operand.vmem [shape: f32[8,2,24,4], index: 0, kind: input, shape index: {}]
  %s1 = inlined_call_operand.vmem [shape: f32[12,64], index: 1, kind: input, shape index: {}]
  %s2 = inlined_call_operand.vmem [shape: f32[1,64], index: 2, kind: input, shape index: {}]
  %s3 = inlined_call_operand.vmem [shape: bf16[192,128], index: 3, kind: input, shape index: {}]
  %s4 = inlined_call_operand.vmem [shape: f32[1,128], index: 4, kind: input, shape index: {}]
  %s5 = inlined_call_operand.vmem [shape: bf16[2048,64], index: 5, kind: input, shape index: {}]
  %s6 = inlined_call_operand.vmem [shape: f32[1,64], index: 6, kind: input, shape index: {}]
  %s7 = inlined_call_operand.vmem [shape: f32[1,64], index: 7, kind: input, shape index: {}]
  %s8 = inlined_call_operand.<no memory space> [shape: f32[1,1], index: 8, kind: input, shape index: {}]
  %s9 = inlined_call_operand.vmem [shape: f32[8,2,1], index: 9, kind: output, shape index: {}]
  %s10 = sld [smem:[#allocation0]]
  $region69: #{cnn_forward.1} parent=0
    _
  %s12 = ssub.s32 1, %s10
  %s13 = scalar_select 0, %s12, %s10
  %v14 = vstv %s8
  %15 = vst [vmem:[#allocation2] sm:$0x1] %v14
  loop: start=0, step=1, limit=10
  $region2: #{cnn_forward.1} parent=0 // loop_pre_header
    _
  $region3: #{cnn_forward.1} parent=0 // loop_header
    %s17 = sphi 0, %s21
    %p18 = scmp.ge.s32.totalorder %s17, 10
    %s27 = sphi 0, %s29
    %s30 = sphi 0, %s27
    %s31 = sphi 0, %s30
    %s47 = sphi 0, %s31
    %s51 = sphi 0, %s51
    %s53 = sphi 0, %s51
    %s54 = sphi 0, %s53
    %s68 = sphi 0, %s54
    %s72 = sphi 0, %s72
    %s74 = sphi 0, %s72
    %s75 = sphi 0, %s74
    %s89 = sphi 0, %s75
    %s93 = sphi 0, %s93
    %s95 = sphi 0, %s93
    %s96 = sphi 0, %s95
    %s110 = sphi 0, %s96
    %s114 = sphi 0, %s114
    %s116 = sphi 0, %s114
    %s117 = sphi 0, %s116
    %s131 = sphi 0, %s117
    %s135 = sphi 0, %s135
    %s137 = sphi 0, %s135
    %s138 = sphi 0, %s137
    %s152 = sphi 0, %s138
    %s156 = sphi 0, %s156
    %s158 = sphi 0, %s156
    %s159 = sphi 0, %s158
    %s173 = sphi 0, %s159
    %s177 = sphi 0, %s177
    %s179 = sphi 0, %s177
    %s180 = sphi 0, %s179
    %s194 = sphi 0, %s180
    %s198 = sphi 0, %s198
    %s200 = sphi 0, %s198
    %s201 = sphi 0, %s200
    %s215 = sphi 0, %s201
    %s221 = sphi 0, %s223
    %s224 = sphi 0, %s221
    %s225 = sphi 0, %s224
    %s241 = sphi 0, %s225
  $region4: #{cnn_forward.1} parent=0 // loop_header_branch
    %20 = sbr.rel (%p18) target = $region8
  $region5: #{cnn_forward.1} parent=0 // loop_body
    %s22 = ssub.s32 %s17, 1
    %s23 = ssub.s32 %s17, 2
    %s24 = sadd.s32 %s17, 1
    %s25 = ssub.s32 %s17, %s24
    %p26 = scmp.eq.s32.totalorder %s25, 0
    %s28 = sadd.s32 %s27, 1
    %s29 = scalar_select %p26, %s27, %s28
    %p32 = pneg %p26
    %p33 = scmp.eq.s32.totalorder %s17, 7
    %p34 = por %p32, %p33
    %p35 = scmp.ne.s32.totalorder %s27, %s30
    %p36 = scmp.eq.s32.totalorder %s17, 0
    %p37 = por %p35, %p36
    %p38 = scmp.ne.s32.totalorder %s27, %s30
    %p39 = scmp.eq.s32.totalorder %s22, 7
    %p40 = por %p38, %p39
    %p41 = scmp.ne.s32.totalorder %s30, %s31
    %p42 = scmp.eq.s32.totalorder %s22, 0
    %p43 = por %p41, %p42
    %p44 = scmp.ne.s32.totalorder %s30, %s31
    %p45 = scmp.eq.s32.totalorder %s23, 7
    %p46 = por %p44, %p45
    %p48 = scmp.ne.s32.totalorder %s31, %s47
    %p49 = scmp.eq.s32.totalorder %s23, 0
    %p50 = por %p48, %p49
    %s52 = sadd.s32 %s51, 1
    %p55 = scmp.eq.s32.totalorder %s17, 7
    %p56 = scmp.ne.s32.totalorder %s51, %s53
    %p57 = scmp.eq.s32.totalorder %s17, 0
    %p58 = por %p56, %p57
    %p59 = scmp.ne.s32.totalorder %s51, %s53
    %p60 = scmp.eq.s32.totalorder %s22, 7
    %p61 = por %p59, %p60
    %p62 = scmp.ne.s32.totalorder %s53, %s54
    %p63 = scmp.eq.s32.totalorder %s22, 0
    %p64 = por %p62, %p63
    %p65 = scmp.ne.s32.totalorder %s53, %s54
    %p66 = scmp.eq.s32.totalorder %s23, 7
    %p67 = por %p65, %p66
    %p69 = scmp.ne.s32.totalorder %s54, %s68
    %p70 = scmp.eq.s32.totalorder %s23, 0
    %p71 = por %p69, %p70
    %s73 = sadd.s32 %s72, 1
    %p76 = scmp.eq.s32.totalorder %s17, 7
    %p77 = scmp.ne.s32.totalorder %s72, %s74
    %p78 = scmp.eq.s32.totalorder %s17, 0
    %p79 = por %p77, %p78
    %p80 = scmp.ne.s32.totalorder %s72, %s74
    %p81 = scmp.eq.s32.totalorder %s22, 7
    %p82 = por %p80, %p81
    %p83 = scmp.ne.s32.totalorder %s74, %s75
    %p84 = scmp.eq.s32.totalorder %s22, 0
    %p85 = por %p83, %p84
    %p86 = scmp.ne.s32.totalorder %s74, %s75
    %p87 = scmp.eq.s32.totalorder %s23, 7
    %p88 = por %p86, %p87
    %p90 = scmp.ne.s32.totalorder %s75, %s89
    %p91 = scmp.eq.s32.totalorder %s23, 0
    %p92 = por %p90, %p91
    %s94 = sadd.s32 %s93, 1
    %p97 = scmp.eq.s32.totalorder %s17, 7
    %p98 = scmp.ne.s32.totalorder %s93, %s95
    %p99 = scmp.eq.s32.totalorder %s17, 0
    %p100 = por %p98, %p99
    %p101 = scmp.ne.s32.totalorder %s93, %s95
    %p102 = scmp.eq.s32.totalorder %s22, 7
    %p103 = por %p101, %p102
    %p104 = scmp.ne.s32.totalorder %s95, %s96
    %p105 = scmp.eq.s32.totalorder %s22, 0
    %p106 = por %p104, %p105
    %p107 = scmp.ne.s32.totalorder %s95, %s96
    %p108 = scmp.eq.s32.totalorder %s23, 7
    %p109 = por %p107, %p108
    %p111 = scmp.ne.s32.totalorder %s96, %s110
    %p112 = scmp.eq.s32.totalorder %s23, 0
    %p113 = por %p111, %p112
    %s115 = sadd.s32 %s114, 1
    %p118 = scmp.eq.s32.totalorder %s17, 7
    %p119 = scmp.ne.s32.totalorder %s114, %s116
    %p120 = scmp.eq.s32.totalorder %s17, 0
    %p121 = por %p119, %p120
    %p122 = scmp.ne.s32.totalorder %s114, %s116
    %p123 = scmp.eq.s32.totalorder %s22, 7
    %p124 = por %p122, %p123
    %p125 = scmp.ne.s32.totalorder %s116, %s117
    %p126 = scmp.eq.s32.totalorder %s22, 0
    %p127 = por %p125, %p126
    %p128 = scmp.ne.s32.totalorder %s116, %s117
    %p129 = scmp.eq.s32.totalorder %s23, 7
    %p130 = por %p128, %p129
    %p132 = scmp.ne.s32.totalorder %s117, %s131
    %p133 = scmp.eq.s32.totalorder %s23, 0
    %p134 = por %p132, %p133
    %s136 = sadd.s32 %s135, 1
    %p139 = scmp.eq.s32.totalorder %s17, 7
    %p140 = scmp.ne.s32.totalorder %s135, %s137
    %p141 = scmp.eq.s32.totalorder %s17, 0
    %p142 = por %p140, %p141
    %p143 = scmp.ne.s32.totalorder %s135, %s137
    %p144 = scmp.eq.s32.totalorder %s22, 7
    %p145 = por %p143, %p144
    %p146 = scmp.ne.s32.totalorder %s137, %s138
    %p147 = scmp.eq.s32.totalorder %s22, 0
    %p148 = por %p146, %p147
    %p149 = scmp.ne.s32.totalorder %s137, %s138
    %p150 = scmp.eq.s32.totalorder %s23, 7
    %p151 = por %p149, %p150
    %p153 = scmp.ne.s32.totalorder %s138, %s152
    %p154 = scmp.eq.s32.totalorder %s23, 0
    %p155 = por %p153, %p154
    %s157 = sadd.s32 %s156, 1
    %p160 = scmp.eq.s32.totalorder %s17, 7
    %p161 = scmp.ne.s32.totalorder %s156, %s158
    %p162 = scmp.eq.s32.totalorder %s17, 0
    %p163 = por %p161, %p162
    %p164 = scmp.ne.s32.totalorder %s156, %s158
    %p165 = scmp.eq.s32.totalorder %s22, 7
    %p166 = por %p164, %p165
    %p167 = scmp.ne.s32.totalorder %s158, %s159
    %p168 = scmp.eq.s32.totalorder %s22, 0
    %p169 = por %p167, %p168
    %p170 = scmp.ne.s32.totalorder %s158, %s159
    %p171 = scmp.eq.s32.totalorder %s23, 7
    %p172 = por %p170, %p171
    %p174 = scmp.ne.s32.totalorder %s159, %s173
    %p175 = scmp.eq.s32.totalorder %s23, 0
    %p176 = por %p174, %p175
    %s178 = sadd.s32 %s177, 1
    %p181 = scmp.eq.s32.totalorder %s17, 7
    %p182 = scmp.ne.s32.totalorder %s177, %s179
    %p183 = scmp.eq.s32.totalorder %s17, 0
    %p184 = por %p182, %p183
    %p185 = scmp.ne.s32.totalorder %s177, %s179
    %p186 = scmp.eq.s32.totalorder %s22, 7
    %p187 = por %p185, %p186
    %p188 = scmp.ne.s32.totalorder %s179, %s180
    %p189 = scmp.eq.s32.totalorder %s22, 0
    %p190 = por %p188, %p189
    %p191 = scmp.ne.s32.totalorder %s179, %s180
    %p192 = scmp.eq.s32.totalorder %s23, 7
    %p193 = por %p191, %p192
    %p195 = scmp.ne.s32.totalorder %s180, %s194
    %p196 = scmp.eq.s32.totalorder %s23, 0
    %p197 = por %p195, %p196
    %s199 = sadd.s32 %s198, 1
    %p202 = scmp.eq.s32.totalorder %s17, 7
    %p203 = scmp.ne.s32.totalorder %s198, %s200
    %p204 = scmp.eq.s32.totalorder %s17, 0
    %p205 = por %p203, %p204
    %p206 = scmp.ne.s32.totalorder %s198, %s200
    %p207 = scmp.eq.s32.totalorder %s22, 7
    %p208 = por %p206, %p207
    %p209 = scmp.ne.s32.totalorder %s200, %s201
    %p210 = scmp.eq.s32.totalorder %s22, 0
    %p211 = por %p209, %p210
    %p212 = scmp.ne.s32.totalorder %s200, %s201
    %p213 = scmp.eq.s32.totalorder %s23, 7
    %p214 = por %p212, %p213
    %p216 = scmp.ne.s32.totalorder %s201, %s215
    %p217 = scmp.eq.s32.totalorder %s23, 0
    %p218 = por %p216, %p217
    %s219 = ssub.s32 %s17, %s24
    %p220 = scmp.eq.s32.totalorder %s219, 0
    %s222 = sadd.s32 %s221, 1
    %s223 = scalar_select %p220, %s221, %s222
    %p226 = pneg %p220
    %p227 = scmp.eq.s32.totalorder %s17, 7
    %p228 = por %p226, %p227
    %p229 = scmp.ne.s32.totalorder %s221, %s224
    %p230 = scmp.eq.s32.totalorder %s17, 0
    %p231 = por %p229, %p230
    %p232 = scmp.ne.s32.totalorder %s221, %s224
    %p233 = scmp.eq.s32.totalorder %s22, 7
    %p234 = por %p232, %p233
    %p235 = scmp.ne.s32.totalorder %s224, %s225
    %p236 = scmp.eq.s32.totalorder %s22, 0
    %p237 = por %p235, %p236
    %p238 = scmp.ne.s32.totalorder %s224, %s225
    %p239 = scmp.eq.s32.totalorder %s23, 7
    %p240 = por %p238, %p239
    %p242 = scmp.ne.s32.totalorder %s225, %s241
    %p243 = scmp.eq.s32.totalorder %s23, 0
    %p244 = por %p242, %p243
    %p245 = scmp.le.s32.totalorder 1, %s17
    %p246 = scmp.lt.s32.totalorder %s17, 9
    %p247 = pnand %p245, %p246
    %p248 = pneg %p247
    // Predicated region
    $region9: #{cnn_forward.1} parent=5 // pred_check
      _
    $region10: #{cnn_forward.1} parent=5 // pred_check_branch
      %250 = sbr.rel (%p247) target = $region12
    $region11: #{cnn_forward.1} parent=5 // pred_region
      %s251 = ssub.s32 %s17, 1
      // Predicated region
      $region13: #{cnn_forward.1} parent=11 // pred_check
        %p252 = pneg %p64
      $region14: #{cnn_forward.1} parent=11 // pred_check_branch
        %254 = sbr.rel (%p252) target = $region16
      $region15: #{cnn_forward.1} parent=11 // pred_region
        _
      $region16: #{cnn_forward.1} parent=11 // pred_fallthru
        _
      // Predicated region
      $region17: #{cnn_forward.1} parent=11 // pred_check
        %p255 = pneg %p85
      $region18: #{cnn_forward.1} parent=11 // pred_check_branch
        %257 = sbr.rel (%p255) target = $region20
      $region19: #{cnn_forward.1} parent=11 // pred_region
        _
      $region20: #{cnn_forward.1} parent=11 // pred_fallthru
        _
      // Predicated region
      $region21: #{cnn_forward.1} parent=11 // pred_check
        %p258 = pneg %p106
      $region22: #{cnn_forward.1} parent=11 // pred_check_branch
        %260 = sbr.rel (%p258) target = $region24
      $region23: #{cnn_forward.1} parent=11 // pred_region
        _
      $region24: #{cnn_forward.1} parent=11 // pred_fallthru
        _
      // Predicated region
      $region25: #{cnn_forward.1} parent=11 // pred_check
        %p261 = pneg %p127
      $region26: #{cnn_forward.1} parent=11 // pred_check_branch
        %263 = sbr.rel (%p261) target = $region28
      $region27: #{cnn_forward.1} parent=11 // pred_region
        _
      $region28: #{cnn_forward.1} parent=11 // pred_fallthru
        _
      // Predicated region
      $region29: #{cnn_forward.1} parent=11 // pred_check
        %p264 = pneg %p148
      $region30: #{cnn_forward.1} parent=11 // pred_check_branch
        %266 = sbr.rel (%p264) target = $region32
      $region31: #{cnn_forward.1} parent=11 // pred_region
        _
      $region32: #{cnn_forward.1} parent=11 // pred_fallthru
        _
      // Predicated region
      $region33: #{cnn_forward.1} parent=11 // pred_check
        %p267 = pneg %p169
      $region34: #{cnn_forward.1} parent=11 // pred_check_branch
        %269 = sbr.rel (%p267) target = $region36
      $region35: #{cnn_forward.1} parent=11 // pred_region
        _
      $region36: #{cnn_forward.1} parent=11 // pred_fallthru
        _
      // Predicated region
      $region37: #{cnn_forward.1} parent=11 // pred_check
        %p270 = pneg %p190
      $region38: #{cnn_forward.1} parent=11 // pred_check_branch
        %272 = sbr.rel (%p270) target = $region40
      $region39: #{cnn_forward.1} parent=11 // pred_region
        _
      $region40: #{cnn_forward.1} parent=11 // pred_fallthru
        _
      // Predicated region
      $region41: #{cnn_forward.1} parent=11 // pred_check
        %p273 = pneg %p211
      $region42: #{cnn_forward.1} parent=11 // pred_check_branch
        %275 = sbr.rel (%p273) target = $region44
      $region43: #{cnn_forward.1} parent=11 // pred_region
        _
      $region44: #{cnn_forward.1} parent=11 // pred_fallthru
        _
    $region12: #{cnn_forward.1} parent=5 // pred_fallthru
      _
    %p276 = scmp.lt.s32.totalorder %s17, 8
    // Predicated region
    $region45: #{cnn_forward.1} parent=5 // pred_check
      %p277 = pneg %p276
    $region46: #{cnn_forward.1} parent=5 // pred_check_branch
      %279 = sbr.rel (%p277) target = $region48
    $region47: #{cnn_forward.1} parent=5 // pred_region
      // Predicated region
      $region49: #{cnn_forward.1} parent=47 // pred_check
        %p280 = pneg %p37
      $region50: #{cnn_forward.1} parent=47 // pred_check_branch
        %282 = sbr.rel (%p280) target = $region52
      $region51: #{cnn_forward.1} parent=47 // pred_region
        %p283 = scmp.lt.s32.totalorder %s17, 7
        %s284 = scalar_select %p283, %s17, 7
        %s285 = smul.addr %s284, 6
        %s286 = smul.addr %s285, 8
        %s287 = scalar_lea.vmem %s0, %s286
      $region52: #{cnn_forward.1} parent=47 // pred_fallthru
        _
    $region48: #{cnn_forward.1} parent=5 // pred_fallthru
      _
    %p288 = scmp.le.s32.totalorder 1, %s17
    %p289 = scmp.lt.s32.totalorder %s17, 9
    %p290 = pnand %p288, %p289
    %p291 = pneg %p290
    // Predicated region
    $region53: #{cnn_forward.1} parent=5 // pred_check
      _
    $region54: #{cnn_forward.1} parent=5 // pred_check_branch
      %293 = sbr.rel (%p290) target = $region56
    $region55: #{cnn_forward.1} parent=5 // pred_region
      %s294 = ssub.s32 %s17, 1
      %p295 = scmp.lt.s32.totalorder %s22, 7
      %s296 = scalar_select %p295, %s22, 7
      %s297 = smul.addr %s296, 6
      %s298 = smul.addr %s297, 8
      %s299 = scalar_lea.vmem %s0, %s298
      %p300 = pneg %p43
      %p301 = pneg %p40
      %p302 = pneg %p64
      %p303 = pneg %p61
      %p304 = pneg %p85
      %p305 = pneg %p82
      %p306 = pneg %p106
      %p307 = pneg %p103
      %p308 = pneg %p127
      %p309 = pneg %p124
      %p310 = pneg %p148
      %p311 = pneg %p145
      %p312 = pneg %p169
      %p313 = pneg %p166
      %p314 = pneg %p190
      %p315 = pneg %p187
      %p316 = pneg %p211
      %p317 = pneg %p208
      %p318 = pneg %p237
      %p319 = pneg %p234
      %p320 = scmp.lt.s32.totalorder %s22, 7
      %s321 = scalar_select %p320, %s22, 7
      %s322 = smul.addr %s321, 2
      %s323 = scalar_lea.vmem %s9, %s322
      %p324 = scmp.lt.s32.totalorder %s22, 7
      %s325 = scalar_select %p324, %s22, 7
      %s326 = smul.addr %s325, 6
      %s327 = smul.addr %s326, 8
      %s328 = scalar_lea.vmem %s0, %s327
      %p329 = scmp.lt.s32.totalorder %s22, 7
      %s330 = scalar_select %p329, %s22, 7
      %s331 = smul.addr %s330, 2
      %s332 = scalar_lea.vmem %s9, %s331
      %v334 = vld [vmem:[%s328] sm:$0xff]
      %v335 = vld [vmem:[%s328 + $0x8] sm:$0xff]
      %v336 = vld [vmem:[%s328 + $0x10] sm:$0xff]
      %v337 = vld [vmem:[%s328 + $0x18] sm:$0xff]
      %v338 = vld [vmem:[%s328 + $0x20] sm:$0xff]
      %v339 = vld [vmem:[%s328 + $0x28] sm:$0xff]
      %vm346 = vcmask 1046528
      %v347 = vrot.slane %v334, 1
      %v348 = vrot.slane %v335, 1
      %v349 = vsel %vm346, %v347, %v348
      %v350 = vrot.slane %v336, 1
      %v351 = vsel %vm346, %v348, %v350
      %v352 = vrot.slane %v337, 1
      %v353 = vsel %vm346, %v350, %v352
      %v354 = vrot.slane %v338, 1
      %v355 = vsel %vm346, %v352, %v354
      %v356 = vrot.slane %v339, 1
      %v357 = vsel %vm346, %v354, %v356
      %358 = vrot.lane.b32.xlu0 %v349, 4
      %v359 = vpop.permute.xlu0 %358
      %360 = vrot.lane.b32.xlu0 %v351, 4
      %v361 = vpop.permute.xlu0 %360
      %362 = vrot.lane.b32.xlu0 %v353, 4
      %v363 = vpop.permute.xlu0 %362
      %364 = vrot.lane.b32.xlu0 %v355, 4
      %v365 = vpop.permute.xlu0 %364
      %366 = vrot.lane.b32.xlu0 %v357, 4
      %v367 = vpop.permute.xlu0 %366
      %368 = vrot.lane.b32.xlu0 %v356, 4
      %v369 = vpop.permute.xlu0 %368
      %vm376 = vcmask 1045504
      %v377 = vrot.slane %v334, 2
      %v378 = vrot.slane %v335, 2
      %v379 = vsel %vm376, %v377, %v378
      %v380 = vrot.slane %v336, 2
      %v381 = vsel %vm376, %v378, %v380
      %v382 = vrot.slane %v337, 2
      %v383 = vsel %vm376, %v380, %v382
      %v384 = vrot.slane %v338, 2
      %v385 = vsel %vm376, %v382, %v384
      %v386 = vrot.slane %v339, 2
      %v387 = vsel %vm376, %v384, %v386
      %388 = vrot.lane.b32.xlu0 %v379, 8
      %v389 = vpop.permute.xlu0 %388
      %390 = vrot.lane.b32.xlu0 %v381, 8
      %v391 = vpop.permute.xlu0 %390
      %392 = vrot.lane.b32.xlu0 %v383, 8
      %v393 = vpop.permute.xlu0 %392
      %394 = vrot.lane.b32.xlu0 %v385, 8
      %v395 = vpop.permute.xlu0 %394
      %396 = vrot.lane.b32.xlu0 %v387, 8
      %v397 = vpop.permute.xlu0 %396
      %398 = vrot.lane.b32.xlu0 %v386, 8
      %v399 = vpop.permute.xlu0 %398
      %vm406 = vcmask 31744
      %v407 = vsel %vm406, %v334, %v359
      %v408 = vsel %vm406, %v335, %v361
      %v409 = vsel %vm406, %v336, %v363
      %v410 = vsel %vm406, %v337, %v365
      %v411 = vsel %vm406, %v338, %v367
      %v412 = vsel %vm406, %v339, %v369
      %vm413 = vcmask 64512
      %v414 = vsel %vm413, %v407, %v389
      %v415 = vsel %vm413, %v408, %v391
      %v416 = vsel %vm413, %v409, %v393
      %v417 = vsel %vm413, %v410, %v395
      %v418 = vsel %vm413, %v411, %v397
      %v419 = vsel %vm413, %v412, %v399
      %v423 = vrot.slane %v417, 2
      %v424 = vrot.slane %v418, 2
      %v425 = vsel %vm376, %v423, %v424
      %v426 = vrot.slane %v419, 2
      %v427 = vsel %vm376, %v424, %v426
      %v429 = vsel %vm376, %v416, %v423
      %v430 = vld [vmem:[%s1] sm:$0xff]
      %v431 = vld [vmem:[%s1 + $0x8] sm:$0xf]
      %v432 = vld [vmem:[%s2] sm:$0x1]
      %v434 = vperm.slane %v432, 0
      %vm436 = vcmask 97280
      %v438 = vsel %vm436, %v414, 0
      %v441 = vsel %vm436, %v415, 0
      %v444 = vsel %vm436, %v429, 0
      %v446 = vsel %vm436, %v425, 0
      %v448 = vsel %vm436, %v427, 0
      %v450 = vsel %vm436, %v426, 0
      %vm452 = vcmask 1043456
      %v454 = vsel %vm452, %v431, 0
      %456 = vmatpush.msra.mxu0 0.0
      %457 = vmatpush.msra.mxu0 0.0
      %458 = vmatpush.msra.mxu0 0.0
      %459 = vmatpush.msra.mxu0 0.0
      %460 = vmatpush.msra.mxu0 0.0
      %461 = vmatpush.msra.mxu0 0.0
      %462 = vmatpush.msra.mxu0 0.0
      %463 = vmatpush.msra.mxu0 0.0
      %464 = vmatpush.msra.mxu0 0.0
      %465 = vmatpush.msra.mxu0 0.0
      %466 = vmatpush.msra.mxu0 0.0
      %467 = vmatpush.msra.mxu0 0.0
      %468 = vmatpush.msra.mxu0 0.0
      %469 = vmatpush.msra.mxu0 0.0
      %470 = vmatpush.msra.mxu0 %v454
      %471 = vmatpush.msra.mxu0 %v430
      %472 = vmatmul.f32.gmra.mxu0 %v438
      %v473 = vpop.f32.mrf.mxu0
      %v474 = vadd.f32 %v434, %v473
      %475 = vmatmul.f32.gmra.mxu0 %v441
      %v476 = vpop.f32.mrf.mxu0
      %v477 = vadd.f32 %v434, %v476
      %478 = vmatmul.f32.gmra.mxu0 %v444
      %v479 = vpop.f32.mrf.mxu0
      %v480 = vadd.f32 %v434, %v479
      %481 = vmatmul.f32.gmra.mxu0 %v446
      %v482 = vpop.f32.mrf.mxu0
      %v483 = vadd.f32 %v434, %v482
      %484 = vmatmul.f32.gmra.mxu0 %v448
      %v485 = vpop.f32.mrf.mxu0
      %v486 = vadd.f32 %v434, %v485
      %487 = vmatmul.f32.gmra.mxu0 %v450
      %v488 = vpop.f32.mrf.mxu0
      %v489 = vadd.f32 %v434, %v488
      %490 = vdwg.mxu0
      %v491 = vmax.f32 %v474, 0.0
      %v492 = vmax.f32 %v477, 0.0
      %v493 = vmax.f32 %v480, 0.0
      %v494 = vmax.f32 %v483, 0.0
      %v495 = vmax.f32 %v486, 0.0
      %v496 = vmax.f32 %v489, 0.0
      %v503 = vrot.slane %v491, 1
      %v504 = vrot.slane %v492, 1
      %v505 = vsel %vm346, %v503, %v504
      %v506 = vrot.slane %v493, 1
      %v507 = vsel %vm346, %v504, %v506
      %v508 = vrot.slane %v494, 1
      %v509 = vsel %vm346, %v506, %v508
      %v510 = vrot.slane %v495, 1
      %v511 = vsel %vm346, %v508, %v510
      %v512 = vrot.slane %v496, 1
      %v513 = vsel %vm346, %v510, %v512
      %v520 = vmax.f32 %v491, %v505
      %v521 = vmax.f32 %v492, %v507
      %v522 = vmax.f32 %v493, %v509
      %v523 = vmax.f32 %v494, %v511
      %v524 = vmax.f32 %v495, %v513
      %v525 = vmax.f32 %v496, %v512
      %v526 = vrot.slane %v491, 2
      %v527 = vrot.slane %v492, 2
      %v528 = vsel %vm376, %v526, %v527
      %v529 = vrot.slane %v493, 2
      %v530 = vsel %vm376, %v527, %v529
      %v531 = vrot.slane %v494, 2
      %v532 = vsel %vm376, %v529, %v531
      %v533 = vrot.slane %v495, 2
      %v534 = vsel %vm376, %v531, %v533
      %v535 = vrot.slane %v496, 2
      %v536 = vsel %vm376, %v533, %v535
      %v543 = vmax.f32 %v520, %v528
      %v544 = vmax.f32 %v521, %v530
      %v545 = vmax.f32 %v522, %v532
      %v546 = vmax.f32 %v523, %v534
      %v547 = vmax.f32 %v524, %v536
      %v548 = vmax.f32 %v525, %v535
      %v553 = vrot.slane %v545, 2
      %v554 = vrot.slane %v546, 2
      %v555 = vsel %vm376, %v553, %v554
      %v556 = vrot.slane %v547, 2
      %v557 = vsel %vm376, %v554, %v556
      %v558 = vrot.slane %v548, 2
      %v559 = vsel %vm376, %v556, %v558
      %v563 = vsel %vm452, %v545, %v555
      %v567 = vrot.slane %v543, 1
      %v568 = vrot.slane %v544, 1
      %v569 = vsel %vm346, %v567, %v568
      %v570 = vrot.slane %v563, 1
      %v571 = vsel %vm346, %v568, %v570
      %v572 = vrot.slane %v557, 1
      %v573 = vsel %vm346, %v570, %v572
      %v574 = vrot.slane %v559, 1
      %v575 = vsel %vm346, %v572, %v574
      %576 = vrot.lane.b32.xlu0 %v569, 64
      %v577 = vpop.permute.xlu0 %576
      %578 = vrot.lane.b32.xlu0 %v571, 64
      %v579 = vpop.permute.xlu0 %578
      %580 = vrot.lane.b32.xlu0 %v573, 64
      %v581 = vpop.permute.xlu0 %580
      %582 = vrot.lane.b32.xlu0 %v575, 64
      %v583 = vpop.permute.xlu0 %582
      %584 = vrot.lane.b32.xlu0 %v574, 64
      %v585 = vpop.permute.xlu0 %584
      %v591 = vrot.slane %v543, 2
      %v592 = vrot.slane %v544, 2
      %v593 = vsel %vm376, %v591, %v592
      %v594 = vrot.slane %v563, 2
      %v595 = vsel %vm376, %v592, %v594
      %v596 = vrot.slane %v557, 2
      %v597 = vsel %vm376, %v594, %v596
      %v598 = vrot.slane %v559, 2
      %v599 = vsel %vm376, %v596, %v598
      %vm603 = vcmask 523264
      %v604 = vsel %vm603, %v543, %v577
      %v605 = vsel %vm603, %v544, %v579
      %v606 = vsel %vm603, %v563, %v581
      %v607 = vsel %vm603, %v557, %v583
      %v608 = vsel %vm603, %v559, %v585
      %v612 = vrot.slane %v606, 2
      %v613 = vrot.slane %v607, 2
      %v614 = vsel %vm376, %v612, %v613
      %v615 = vrot.slane %v597, 2
      %v616 = vrot.slane %v599, 2
      %v617 = vsel %vm376, %v615, %v616
      %v618 = vrot.slane %v608, 2
      %v619 = vsel %vm376, %v613, %v618
      %v620 = vrot.slane %v598, 2
      %v621 = vsel %vm376, %v616, %v620
      %vm628 = vcmask 1041408
      %v629 = vsel %vm628, %v606, %v614
      %v630 = vsel %vm628, %v597, %v617
      %v631 = vpack.c.bf16 %v605, %v604
      %v632 = vpack.c.bf16 %v595, %v593
      %v633 = vpack.c.bf16 %v619, %v629
      %v634 = vpack.c.bf16 %v621, %v630
      %v635 = vpack.c.bf16 %v618, %v618
      %v636 = vpack.c.bf16 %v620, %v620
      %v637 = vld [vmem:[%s3] sm:$0xf]
      %v638 = vld [vmem:[%s3 + $0x4] sm:$0xf]
      %v639 = vld [vmem:[%s3 + $0x8] sm:$0xf]
      %v640 = vld [vmem:[%s3 + $0xc] sm:$0xf]
      %v641 = vld [vmem:[%s3 + $0x10] sm:$0xf]
      %v642 = vld [vmem:[%s3 + $0x14] sm:$0xf]
      %v643 = vld [vmem:[%s3 + $0x18] sm:$0xf]
      %v644 = vld [vmem:[%s3 + $0x1c] sm:$0xf]
      %v645 = vld [vmem:[%s3 + $0x20] sm:$0xf]
      %v646 = vld [vmem:[%s3 + $0x24] sm:$0xf]
      %v647 = vld [vmem:[%s3 + $0x28] sm:$0xf]
      %v648 = vld [vmem:[%s3 + $0x2c] sm:$0xf]
      %v649 = vld [vmem:[%s3 + $0x30] sm:$0xf]
      %v650 = vld [vmem:[%s3 + $0x34] sm:$0xf]
      %v651 = vld [vmem:[%s3 + $0x38] sm:$0xf]
      %v652 = vld [vmem:[%s3 + $0x3c] sm:$0xf]
      %v653 = vld [vmem:[%s3 + $0x40] sm:$0xf]
      %v654 = vld [vmem:[%s3 + $0x44] sm:$0xf]
      %v655 = vld [vmem:[%s3 + $0x48] sm:$0xf]
      %v656 = vld [vmem:[%s3 + $0x4c] sm:$0xf]
      %v657 = vld [vmem:[%s3 + $0x50] sm:$0xf]
      %v658 = vld [vmem:[%s3 + $0x54] sm:$0xf]
      %v659 = vld [vmem:[%s3 + $0x58] sm:$0xf]
      %v660 = vld [vmem:[%s3 + $0x5c] sm:$0xf]
      %v661 = vld [vmem:[%s4] sm:$0x1]
      %v663 = vperm.slane %v661, 0
      %v689 = vunpack.c.l.b16 %v637
      %v690 = vunpack.c.l.b16 %v638
      %v691 = vunpack.c.l.b16 %v639
      %v692 = vunpack.c.l.b16 %v640
      %v693 = vunpack.c.l.b16 %v641
      %v694 = vunpack.c.l.b16 %v642
      %v695 = vunpack.c.l.b16 %v643
      %v696 = vunpack.c.l.b16 %v644
      %v697 = vunpack.c.l.b16 %v645
      %v698 = vunpack.c.l.b16 %v646
      %v699 = vunpack.c.l.b16 %v647
      %v700 = vunpack.c.l.b16 %v648
      %v701 = vunpack.c.l.b16 %v649
      %v702 = vunpack.c.l.b16 %v650
      %v703 = vunpack.c.l.b16 %v651
      %v704 = vunpack.c.l.b16 %v652
      %v705 = vunpack.c.l.b16 %v653
      %v706 = vunpack.c.l.b16 %v654
      %v707 = vunpack.c.l.b16 %v655
      %v708 = vunpack.c.l.b16 %v656
      %v709 = vunpack.c.l.b16 %v657
      %v710 = vunpack.c.l.b16 %v658
      %v711 = vunpack.c.l.b16 %v659
      %v712 = vunpack.c.l.b16 %v660
      %v713 = vpack.c.b16 %v690, %v689
      %v714 = vpack.c.b16 %v692, %v691
      %v715 = vpack.c.b16 %v694, %v693
      %v716 = vpack.c.b16 %v696, %v695
      %v717 = vpack.c.b16 %v698, %v697
      %v718 = vpack.c.b16 %v700, %v699
      %v719 = vpack.c.b16 %v702, %v701
      %v720 = vpack.c.b16 %v704, %v703
      %v721 = vpack.c.b16 %v706, %v705
      %v722 = vpack.c.b16 %v708, %v707
      %v723 = vpack.c.b16 %v710, %v709
      %v724 = vpack.c.b16 %v712, %v711
      %v738 = vsel %vm603, %v632, 0
      %v741 = vsel %vm603, %v634, 0
      %v744 = vsel %vm603, %v636, 0
      %746 = vmatpush.bf16.msra.mxu0 %v720
      %747 = vmatpush.bf16.msra.mxu0 %v719
      %748 = vmatpush.bf16.msra.mxu0 %v718
      %749 = vmatpush.bf16.msra.mxu0 %v717
      %750 = vmatpush.bf16.msra.mxu0 %v716
      %751 = vmatpush.bf16.msra.mxu0 %v715
      %752 = vmatpush.bf16.msra.mxu0 %v714
      %753 = vmatpush.bf16.msra.mxu0 %v713
      %754 = vmatmul.bf16.gmra.mxu0 %v631
      %v755 = vpop.f32.mrf.mxu0
      %v756 = vadd.f32 %v663, %v755
      %v757 = vpop.f32.mrf.mxu0
      %v758 = vadd.f32 %v663, %v757
      %759 = vmatmul.bf16.gmra.mxu0 %v633
      %v760 = vpop.f32.mrf.mxu0
      %v761 = vadd.f32 %v663, %v760
      %v762 = vpop.f32.mrf.mxu0
      %v763 = vadd.f32 %v663, %v762
      %764 = vmatmul.bf16.gmra.mxu0 %v635
      %v765 = vpop.f32.mrf.mxu0
      %v766 = vadd.f32 %v663, %v765
      %v767 = vpop.f32.mrf.mxu0
      %768 = vdwg.mxu0
      %769 = vmatpush.bf16.msra.mxu0 0
      %770 = vmatpush.bf16.msra.mxu0 0
      %771 = vmatpush.bf16.msra.mxu0 0
      %772 = vmatpush.bf16.msra.mxu0 0
      %773 = vmatpush.bf16.msra.mxu0 %v724
      %774 = vmatpush.bf16.msra.mxu0 %v723
      %775 = vmatpush.bf16.msra.mxu0 %v722
      %776 = vmatpush.bf16.msra.mxu0 %v721
      %777 = vmatmul.bf16.gmra.mxu0 %v738
      %v778 = vpop.f32.mrf.mxu0
      %v779 = vadd.f32 %v756, %v778
      %v780 = vpop.f32.mrf.mxu0
      %v781 = vadd.f32 %v758, %v780
      %782 = vmatmul.bf16.gmra.mxu0 %v741
      %v783 = vpop.f32.mrf.mxu0
      %v784 = vadd.f32 %v761, %v783
      %v785 = vpop.f32.mrf.mxu0
      %v786 = vadd.f32 %v763, %v785
      %787 = vmatmul.bf16.gmra.mxu0 %v744
      %v788 = vpop.f32.mrf.mxu0
      %v789 = vadd.f32 %v766, %v788
      %v790 = vpop.f32.mrf.mxu0
      %791 = vdwg.mxu0
      %v792 = vmax.f32 %v779, 0.0
      %v793 = vmax.f32 %v781, 0.0
      %v794 = vmax.f32 %v784, 0.0
      %v795 = vmax.f32 %v786, 0.0
      %v796 = vmax.f32 %v789, 0.0
      %v802 = vrot.slane %v792, 1
      %v803 = vrot.slane %v793, 1
      %v804 = vsel %vm346, %v802, %v803
      %v805 = vrot.slane %v794, 1
      %v806 = vsel %vm346, %v803, %v805
      %v807 = vrot.slane %v795, 1
      %v808 = vsel %vm346, %v805, %v807
      %v809 = vrot.slane %v796, 1
      %v810 = vsel %vm346, %v807, %v809
      %v816 = vmax.f32 %v792, %v804
      %v817 = vmax.f32 %v793, %v806
      %v818 = vmax.f32 %v794, %v808
      %v819 = vmax.f32 %v795, %v810
      %v820 = vmax.f32 %v796, %v809
      %v821 = vrot.slane %v792, 2
      %v822 = vrot.slane %v793, 2
      %v823 = vsel %vm376, %v821, %v822
      %v824 = vrot.slane %v794, 2
      %v825 = vsel %vm376, %v822, %v824
      %v826 = vrot.slane %v795, 2
      %v827 = vsel %vm376, %v824, %v826
      %v828 = vrot.slane %v796, 2
      %v829 = vsel %vm376, %v826, %v828
      %v835 = vmax.f32 %v816, %v823
      %v836 = vmax.f32 %v817, %v825
      %v837 = vmax.f32 %v818, %v827
      %v838 = vmax.f32 %v819, %v829
      %v839 = vmax.f32 %v820, %v828
      %v843 = vrot.slane %v837, 2
      %v844 = vrot.slane %v838, 2
      %v845 = vsel %vm376, %v843, %v844
      %v846 = vrot.slane %v839, 2
      %v847 = vsel %vm376, %v844, %v846
      %850 = vst [vmem:[#allocation1] ss:$9 sm:$0xff] %v835
      %s851 = scalar_lea.vmem [#allocation1], 1
      %852 = vst [vmem:[%s851] ss:$9 sm:$0xff] %v845
      %v853 = vld [vmem:[#allocation1] sm:$0xff]
      %v854 = vld [vmem:[#allocation1 + $0x9] sm:$0xff]
      %v855 = vld [vmem:[#allocation1 + $0x12] sm:$0xff]
      %v856 = vld [vmem:[#allocation1 + $0x1b] sm:$0xff]
      %v857 = vld [vmem:[#allocation1 + $0x24] sm:$0xff]
      %v858 = vld [vmem:[#allocation1 + $0x2d] sm:$0xff]
      %v859 = vld [vmem:[#allocation1 + $0x36] sm:$0xff]
      %v860 = vld [vmem:[#allocation1 + $0x3f] sm:$0xff]
      %861 = vst [vmem:[#allocation1] ss:$9 sm:$0xff] %v836
      %862 = vst [vmem:[%s851] ss:$9 sm:$0xff] %v847
      %v863 = vld [vmem:[#allocation1] sm:$0xff]
      %v864 = vld [vmem:[#allocation1 + $0x9] sm:$0xff]
      %v865 = vld [vmem:[#allocation1 + $0x12] sm:$0xff]
      %v866 = vld [vmem:[#allocation1 + $0x1b] sm:$0xff]
      %v867 = vld [vmem:[#allocation1 + $0x24] sm:$0xff]
      %v868 = vld [vmem:[#allocation1 + $0x2d] sm:$0xff]
      %v869 = vld [vmem:[#allocation1 + $0x36] sm:$0xff]
      %v870 = vld [vmem:[#allocation1 + $0x3f] sm:$0xff]
      %v887 = vpack.c.bf16 %v853, %v853
      %v888 = vpack.c.bf16 %v854, %v854
      %v889 = vpack.c.bf16 %v855, %v855
      %v890 = vpack.c.bf16 %v856, %v856
      %v891 = vpack.c.bf16 %v857, %v857
      %v892 = vpack.c.bf16 %v858, %v858
      %v893 = vpack.c.bf16 %v859, %v859
      %v894 = vpack.c.bf16 %v860, %v860
      %v895 = vpack.c.bf16 %v863, %v863
      %v896 = vpack.c.bf16 %v864, %v864
      %v897 = vpack.c.bf16 %v865, %v865
      %v898 = vpack.c.bf16 %v866, %v866
      %v899 = vpack.c.bf16 %v867, %v867
      %v900 = vpack.c.bf16 %v868, %v868
      %v901 = vpack.c.bf16 %v869, %v869
      %v902 = vpack.c.bf16 %v870, %v870
      %v903 = vld [vmem:[%s5] sm:$0xf]
      %v904 = vld [vmem:[%s5 + $0x4] sm:$0xf]
      %v905 = vld [vmem:[%s5 + $0x8] sm:$0xf]
      %v906 = vld [vmem:[%s5 + $0xc] sm:$0xf]
      %v907 = vld [vmem:[%s5 + $0x10] sm:$0xf]
      %v908 = vld [vmem:[%s5 + $0x14] sm:$0xf]
      %v909 = vld [vmem:[%s5 + $0x18] sm:$0xf]
      %v910 = vld [vmem:[%s5 + $0x1c] sm:$0xf]
      %v911 = vld [vmem:[%s5 + $0x20] sm:$0xf]
      %v912 = vld [vmem:[%s5 + $0x24] sm:$0xf]
      %v913 = vld [vmem:[%s5 + $0x28] sm:$0xf]
      %v914 = vld [vmem:[%s5 + $0x2c] sm:$0xf]
      %v915 = vld [vmem:[%s5 + $0x30] sm:$0xf]
      %v916 = vld [vmem:[%s5 + $0x34] sm:$0xf]
      %v917 = vld [vmem:[%s5 + $0x38] sm:$0xf]
      %v918 = vld [vmem:[%s5 + $0x3c] sm:$0xf]
      %v919 = vld [vmem:[%s5 + $0x40] sm:$0xf]
      %v920 = vld [vmem:[%s5 + $0x44] sm:$0xf]
      %v921 = vld [vmem:[%s5 + $0x48] sm:$0xf]
      %v922 = vld [vmem:[%s5 + $0x4c] sm:$0xf]
      %v923 = vld [vmem:[%s5 + $0x50] sm:$0xf]
      %v924 = vld [vmem:[%s5 + $0x54] sm:$0xf]
      %v925 = vld [vmem:[%s5 + $0x58] sm:$0xf]
      %v926 = vld [vmem:[%s5 + $0x5c] sm:$0xf]
      %v927 = vld [vmem:[%s5 + $0x60] sm:$0xf]
      %v928 = vld [vmem:[%s5 + $0x64] sm:$0xf]
      %v929 = vld [vmem:[%s5 + $0x68] sm:$0xf]
      %v930 = vld [vmem:[%s5 + $0x6c] sm:$0xf]
      %v931 = vld [vmem:[%s5 + $0x70] sm:$0xf]
      %v932 = vld [vmem:[%s5 + $0x74] sm:$0xf]
      %v933 = vld [vmem:[%s5 + $0x78] sm:$0xf]
      %v934 = vld [vmem:[%s5 + $0x7c] sm:$0xf]
      %v935 = vld [vmem:[%s5 + $0x80] sm:$0xf]
      %v936 = vld [vmem:[%s5 + $0x84] sm:$0xf]
      %v937 = vld [vmem:[%s5 + $0x88] sm:$0xf]
      %v938 = vld [vmem:[%s5 + $0x8c] sm:$0xf]
      %v939 = vld [vmem:[%s5 + $0x90] sm:$0xf]
      %v940 = vld [vmem:[%s5 + $0x94] sm:$0xf]
      %v941 = vld [vmem:[%s5 + $0x98] sm:$0xf]
      %v942 = vld [vmem:[%s5 + $0x9c] sm:$0xf]
      %v943 = vld [vmem:[%s5 + $0xa0] sm:$0xf]
      %v944 = vld [vmem:[%s5 + $0xa4] sm:$0xf]
      %v945 = vld [vmem:[%s5 + $0xa8] sm:$0xf]
      %v946 = vld [vmem:[%s5 + $0xac] sm:$0xf]
      %v947 = vld [vmem:[%s5 + $0xb0] sm:$0xf]
      %v948 = vld [vmem:[%s5 + $0xb4] sm:$0xf]
      %v949 = vld [vmem:[%s5 + $0xb8] sm:$0xf]
      %v950 = vld [vmem:[%s5 + $0xbc] sm:$0xf]
      %v951 = vld [vmem:[%s5 + $0xc0] sm:$0xf]
      %v952 = vld [vmem:[%s5 + $0xc4] sm:$0xf]
      %v953 = vld [vmem:[%s5 + $0xc8] sm:$0xf]
      %v954 = vld [vmem:[%s5 + $0xcc] sm:$0xf]
      %v955 = vld [vmem:[%s5 + $0xd0] sm:$0xf]
      %v956 = vld [vmem:[%s5 + $0xd4] sm:$0xf]
      %v957 = vld [vmem:[%s5 + $0xd8] sm:$0xf]
      %v958 = vld [vmem:[%s5 + $0xdc] sm:$0xf]
      %v959 = vld [vmem:[%s5 + $0xe0] sm:$0xf]
      %v960 = vld [vmem:[%s5 + $0xe4] sm:$0xf]
      %v961 = vld [vmem:[%s5 + $0xe8] sm:$0xf]
      %v962 = vld [vmem:[%s5 + $0xec] sm:$0xf]
      %v963 = vld [vmem:[%s5 + $0xf0] sm:$0xf]
      %v964 = vld [vmem:[%s5 + $0xf4] sm:$0xf]
      %v965 = vld [vmem:[%s5 + $0xf8] sm:$0xf]
      %v966 = vld [vmem:[%s5 + $0xfc] sm:$0xf]
      %v967 = vld [vmem:[%s5 + $0x100] sm:$0xf]
      %v968 = vld [vmem:[%s5 + $0x104] sm:$0xf]
      %v969 = vld [vmem:[%s5 + $0x108] sm:$0xf]
      %v970 = vld [vmem:[%s5 + $0x10c] sm:$0xf]
      %v971 = vld [vmem:[%s5 + $0x110] sm:$0xf]
      %v972 = vld [vmem:[%s5 + $0x114] sm:$0xf]
      %v973 = vld [vmem:[%s5 + $0x118] sm:$0xf]
      %v974 = vld [vmem:[%s5 + $0x11c] sm:$0xf]
      %v975 = vld [vmem:[%s5 + $0x120] sm:$0xf]
      %v976 = vld [vmem:[%s5 + $0x124] sm:$0xf]
      %v977 = vld [vmem:[%s5 + $0x128] sm:$0xf]
      %v978 = vld [vmem:[%s5 + $0x12c] sm:$0xf]
      %v979 = vld [vmem:[%s5 + $0x130] sm:$0xf]
      %v980 = vld [vmem:[%s5 + $0x134] sm:$0xf]
      %v981 = vld [vmem:[%s5 + $0x138] sm:$0xf]
      %v982 = vld [vmem:[%s5 + $0x13c] sm:$0xf]
      %v983 = vld [vmem:[%s5 + $0x140] sm:$0xf]
      %v984 = vld [vmem:[%s5 + $0x144] sm:$0xf]
      %v985 = vld [vmem:[%s5 + $0x148] sm:$0xf]
      %v986 = vld [vmem:[%s5 + $0x14c] sm:$0xf]
      %v987 = vld [vmem:[%s5 + $0x150] sm:$0xf]
      %v988 = vld [vmem:[%s5 + $0x154] sm:$0xf]
      %v989 = vld [vmem:[%s5 + $0x158] sm:$0xf]
      %v990 = vld [vmem:[%s5 + $0x15c] sm:$0xf]
      %v991 = vld [vmem:[%s5 + $0x160] sm:$0xf]
      %v992 = vld [vmem:[%s5 + $0x164] sm:$0xf]
      %v993 = vld [vmem:[%s5 + $0x168] sm:$0xf]
      %v994 = vld [vmem:[%s5 + $0x16c] sm:$0xf]
      %v995 = vld [vmem:[%s5 + $0x170] sm:$0xf]
      %v996 = vld [vmem:[%s5 + $0x174] sm:$0xf]
      %v997 = vld [vmem:[%s5 + $0x178] sm:$0xf]
      %v998 = vld [vmem:[%s5 + $0x17c] sm:$0xf]
      %v999 = vld [vmem:[%s5 + $0x180] sm:$0xf]
      %v1000 = vld [vmem:[%s5 + $0x184] sm:$0xf]
      %v1001 = vld [vmem:[%s5 + $0x188] sm:$0xf]
      %v1002 = vld [vmem:[%s5 + $0x18c] sm:$0xf]
      %v1003 = vld [vmem:[%s5 + $0x190] sm:$0xf]
      %v1004 = vld [vmem:[%s5 + $0x194] sm:$0xf]
      %v1005 = vld [vmem:[%s5 + $0x198] sm:$0xf]
      %v1006 = vld [vmem:[%s5 + $0x19c] sm:$0xf]
      %v1007 = vld [vmem:[%s5 + $0x1a0] sm:$0xf]
      %v1008 = vld [vmem:[%s5 + $0x1a4] sm:$0xf]
      %v1009 = vld [vmem:[%s5 + $0x1a8] sm:$0xf]
      %v1010 = vld [vmem:[%s5 + $0x1ac] sm:$0xf]
      %v1011 = vld [vmem:[%s5 + $0x1b0] sm:$0xf]
      %v1012 = vld [vmem:[%s5 + $0x1b4] sm:$0xf]
      %v1013 = vld [vmem:[%s5 + $0x1b8] sm:$0xf]
      %v1014 = vld [vmem:[%s5 + $0x1bc] sm:$0xf]
      %v1015 = vld [vmem:[%s5 + $0x1c0] sm:$0xf]
      %v1016 = vld [vmem:[%s5 + $0x1c4] sm:$0xf]
      %v1017 = vld [vmem:[%s5 + $0x1c8] sm:$0xf]
      %v1018 = vld [vmem:[%s5 + $0x1cc] sm:$0xf]
      %v1019 = vld [vmem:[%s5 + $0x1d0] sm:$0xf]
      %v1020 = vld [vmem:[%s5 + $0x1d4] sm:$0xf]
      %v1021 = vld [vmem:[%s5 + $0x1d8] sm:$0xf]
      %v1022 = vld [vmem:[%s5 + $0x1dc] sm:$0xf]
      %v1023 = vld [vmem:[%s5 + $0x1e0] sm:$0xf]
      %v1024 = vld [vmem:[%s5 + $0x1e4] sm:$0xf]
      %v1025 = vld [vmem:[%s5 + $0x1e8] sm:$0xf]
      %v1026 = vld [vmem:[%s5 + $0x1ec] sm:$0xf]
      %v1027 = vld [vmem:[%s5 + $0x1f0] sm:$0xf]
      %v1028 = vld [vmem:[%s5 + $0x1f4] sm:$0xf]
      %v1029 = vld [vmem:[%s5 + $0x1f8] sm:$0xf]
      %v1030 = vld [vmem:[%s5 + $0x1fc] sm:$0xf]
      %v1031 = vld [vmem:[%s5 + $0x200] sm:$0xf]
      %v1032 = vld [vmem:[%s5 + $0x204] sm:$0xf]
      %v1033 = vld [vmem:[%s5 + $0x208] sm:$0xf]
      %v1034 = vld [vmem:[%s5 + $0x20c] sm:$0xf]
      %v1035 = vld [vmem:[%s5 + $0x210] sm:$0xf]
      %v1036 = vld [vmem:[%s5 + $0x214] sm:$0xf]
      %v1037 = vld [vmem:[%s5 + $0x218] sm:$0xf]
      %v1038 = vld [vmem:[%s5 + $0x21c] sm:$0xf]
      %v1039 = vld [vmem:[%s5 + $0x220] sm:$0xf]
      %v1040 = vld [vmem:[%s5 + $0x224] sm:$0xf]
      %v1041 = vld [vmem:[%s5 + $0x228] sm:$0xf]
      %v1042 = vld [vmem:[%s5 + $0x22c] sm:$0xf]
      %v1043 = vld [vmem:[%s5 + $0x230] sm:$0xf]
      %v1044 = vld [vmem:[%s5 + $0x234] sm:$0xf]
      %v1045 = vld [vmem:[%s5 + $0x238] sm:$0xf]
      %v1046 = vld [vmem:[%s5 + $0x23c] sm:$0xf]
      %v1047 = vld [vmem:[%s5 + $0x240] sm:$0xf]
      %v1048 = vld [vmem:[%s5 + $0x244] sm:$0xf]
      %v1049 = vld [vmem:[%s5 + $0x248] sm:$0xf]
      %v1050 = vld [vmem:[%s5 + $0x24c] sm:$0xf]
      %v1051 = vld [vmem:[%s5 + $0x250] sm:$0xf]
      %v1052 = vld [vmem:[%s5 + $0x254] sm:$0xf]
      %v1053 = vld [vmem:[%s5 + $0x258] sm:$0xf]
      %v1054 = vld [vmem:[%s5 + $0x25c] sm:$0xf]
      %v1055 = vld [vmem:[%s5 + $0x260] sm:$0xf]
      %v1056 = vld [vmem:[%s5 + $0x264] sm:$0xf]
      %v1057 = vld [vmem:[%s5 + $0x268] sm:$0xf]
      %v1058 = vld [vmem:[%s5 + $0x26c] sm:$0xf]
      %v1059 = vld [vmem:[%s5 + $0x270] sm:$0xf]
      %v1060 = vld [vmem:[%s5 + $0x274] sm:$0xf]
      %v1061 = vld [vmem:[%s5 + $0x278] sm:$0xf]
      %v1062 = vld [vmem:[%s5 + $0x27c] sm:$0xf]
      %v1063 = vld [vmem:[%s5 + $0x280] sm:$0xf]
      %v1064 = vld [vmem:[%s5 + $0x284] sm:$0xf]
      %v1065 = vld [vmem:[%s5 + $0x288] sm:$0xf]
      %v1066 = vld [vmem:[%s5 + $0x28c] sm:$0xf]
      %v1067 = vld [vmem:[%s5 + $0x290] sm:$0xf]
      %v1068 = vld [vmem:[%s5 + $0x294] sm:$0xf]
      %v1069 = vld [vmem:[%s5 + $0x298] sm:$0xf]
      %v1070 = vld [vmem:[%s5 + $0x29c] sm:$0xf]
      %v1071 = vld [vmem:[%s5 + $0x2a0] sm:$0xf]
      %v1072 = vld [vmem:[%s5 + $0x2a4] sm:$0xf]
      %v1073 = vld [vmem:[%s5 + $0x2a8] sm:$0xf]
      %v1074 = vld [vmem:[%s5 + $0x2ac] sm:$0xf]
      %v1075 = vld [vmem:[%s5 + $0x2b0] sm:$0xf]
      %v1076 = vld [vmem:[%s5 + $0x2b4] sm:$0xf]
      %v1077 = vld [vmem:[%s5 + $0x2b8] sm:$0xf]
      %v1078 = vld [vmem:[%s5 + $0x2bc] sm:$0xf]
      %v1079 = vld [vmem:[%s5 + $0x2c0] sm:$0xf]
      %v1080 = vld [vmem:[%s5 + $0x2c4] sm:$0xf]
      %v1081 = vld [vmem:[%s5 + $0x2c8] sm:$0xf]
      %v1082 = vld [vmem:[%s5 + $0x2cc] sm:$0xf]
      %v1083 = vld [vmem:[%s5 + $0x2d0] sm:$0xf]
      %v1084 = vld [vmem:[%s5 + $0x2d4] sm:$0xf]
      %v1085 = vld [vmem:[%s5 + $0x2d8] sm:$0xf]
      %v1086 = vld [vmem:[%s5 + $0x2dc] sm:$0xf]
      %v1087 = vld [vmem:[%s5 + $0x2e0] sm:$0xf]
      %v1088 = vld [vmem:[%s5 + $0x2e4] sm:$0xf]
      %v1089 = vld [vmem:[%s5 + $0x2e8] sm:$0xf]
      %v1090 = vld [vmem:[%s5 + $0x2ec] sm:$0xf]
      %v1091 = vld [vmem:[%s5 + $0x2f0] sm:$0xf]
      %v1092 = vld [vmem:[%s5 + $0x2f4] sm:$0xf]
      %v1093 = vld [vmem:[%s5 + $0x2f8] sm:$0xf]
      %v1094 = vld [vmem:[%s5 + $0x2fc] sm:$0xf]
      %v1095 = vld [vmem:[%s5 + $0x300] sm:$0xf]
      %v1096 = vld [vmem:[%s5 + $0x304] sm:$0xf]
      %v1097 = vld [vmem:[%s5 + $0x308] sm:$0xf]
      %v1098 = vld [vmem:[%s5 + $0x30c] sm:$0xf]
      %v1099 = vld [vmem:[%s5 + $0x310] sm:$0xf]
      %v1100 = vld [vmem:[%s5 + $0x314] sm:$0xf]
      %v1101 = vld [vmem:[%s5 + $0x318] sm:$0xf]
      %v1102 = vld [vmem:[%s5 + $0x31c] sm:$0xf]
      %v1103 = vld [vmem:[%s5 + $0x320] sm:$0xf]
      %v1104 = vld [vmem:[%s5 + $0x324] sm:$0xf]
      %v1105 = vld [vmem:[%s5 + $0x328] sm:$0xf]
      %v1106 = vld [vmem:[%s5 + $0x32c] sm:$0xf]
      %v1107 = vld [vmem:[%s5 + $0x330] sm:$0xf]
      %v1108 = vld [vmem:[%s5 + $0x334] sm:$0xf]
      %v1109 = vld [vmem:[%s5 + $0x338] sm:$0xf]
      %v1110 = vld [vmem:[%s5 + $0x33c] sm:$0xf]
      %v1111 = vld [vmem:[%s5 + $0x340] sm:$0xf]
      %v1112 = vld [vmem:[%s5 + $0x344] sm:$0xf]
      %v1113 = vld [vmem:[%s5 + $0x348] sm:$0xf]
      %v1114 = vld [vmem:[%s5 + $0x34c] sm:$0xf]
      %v1115 = vld [vmem:[%s5 + $0x350] sm:$0xf]
      %v1116 = vld [vmem:[%s5 + $0x354] sm:$0xf]
      %v1117 = vld [vmem:[%s5 + $0x358] sm:$0xf]
      %v1118 = vld [vmem:[%s5 + $0x35c] sm:$0xf]
      %v1119 = vld [vmem:[%s5 + $0x360] sm:$0xf]
      %v1120 = vld [vmem:[%s5 + $0x364] sm:$0xf]
      %v1121 = vld [vmem:[%s5 + $0x368] sm:$0xf]
      %v1122 = vld [vmem:[%s5 + $0x36c] sm:$0xf]
      %v1123 = vld [vmem:[%s5 + $0x370] sm:$0xf]
      %v1124 = vld [vmem:[%s5 + $0x374] sm:$0xf]
      %v1125 = vld [vmem:[%s5 + $0x378] sm:$0xf]
      %v1126 = vld [vmem:[%s5 + $0x37c] sm:$0xf]
      %v1127 = vld [vmem:[%s5 + $0x380] sm:$0xf]
      %v1128 = vld [vmem:[%s5 + $0x384] sm:$0xf]
      %v1129 = vld [vmem:[%s5 + $0x388] sm:$0xf]
      %v1130 = vld [vmem:[%s5 + $0x38c] sm:$0xf]
      %v1131 = vld [vmem:[%s5 + $0x390] sm:$0xf]
      %v1132 = vld [vmem:[%s5 + $0x394] sm:$0xf]
      %v1133 = vld [vmem:[%s5 + $0x398] sm:$0xf]
      %v1134 = vld [vmem:[%s5 + $0x39c] sm:$0xf]
      %v1135 = vld [vmem:[%s5 + $0x3a0] sm:$0xf]
      %v1136 = vld [vmem:[%s5 + $0x3a4] sm:$0xf]
      %v1137 = vld [vmem:[%s5 + $0x3a8] sm:$0xf]
      %v1138 = vld [vmem:[%s5 + $0x3ac] sm:$0xf]
      %v1139 = vld [vmem:[%s5 + $0x3b0] sm:$0xf]
      %v1140 = vld [vmem:[%s5 + $0x3b4] sm:$0xf]
      %v1141 = vld [vmem:[%s5 + $0x3b8] sm:$0xf]
      %v1142 = vld [vmem:[%s5 + $0x3bc] sm:$0xf]
      %v1143 = vld [vmem:[%s5 + $0x3c0] sm:$0xf]
      %v1144 = vld [vmem:[%s5 + $0x3c4] sm:$0xf]
      %v1145 = vld [vmem:[%s5 + $0x3c8] sm:$0xf]
      %v1146 = vld [vmem:[%s5 + $0x3cc] sm:$0xf]
      %v1147 = vld [vmem:[%s5 + $0x3d0] sm:$0xf]
      %v1148 = vld [vmem:[%s5 + $0x3d4] sm:$0xf]
      %v1149 = vld [vmem:[%s5 + $0x3d8] sm:$0xf]
      %v1150 = vld [vmem:[%s5 + $0x3dc] sm:$0xf]
      %v1151 = vld [vmem:[%s5 + $0x3e0] sm:$0xf]
      %v1152 = vld [vmem:[%s5 + $0x3e4] sm:$0xf]
      %v1153 = vld [vmem:[%s5 + $0x3e8] sm:$0xf]
      %v1154 = vld [vmem:[%s5 + $0x3ec] sm:$0xf]
      %v1155 = vld [vmem:[%s5 + $0x3f0] sm:$0xf]
      %v1156 = vld [vmem:[%s5 + $0x3f4] sm:$0xf]
      %v1157 = vld [vmem:[%s5 + $0x3f8] sm:$0xf]
      %v1158 = vld [vmem:[%s5 + $0x3fc] sm:$0xf]
      %v1159 = vld [vmem:[%s6] sm:$0x1]
      %v1161 = vperm.slane %v1159, 0
      %v1419 = vunpack.c.l.b16 %v903
      %v1420 = vunpack.c.l.b16 %v904
      %v1421 = vunpack.c.l.b16 %v905
      %v1422 = vunpack.c.l.b16 %v906
      %v1423 = vunpack.c.l.b16 %v907
      %v1424 = vunpack.c.l.b16 %v908
      %v1425 = vunpack.c.l.b16 %v909
      %v1426 = vunpack.c.l.b16 %v910
      %v1427 = vunpack.c.l.b16 %v911
      %v1428 = vunpack.c.l.b16 %v912
      %v1429 = vunpack.c.l.b16 %v913
      %v1430 = vunpack.c.l.b16 %v914
      %v1431 = vunpack.c.l.b16 %v915
      %v1432 = vunpack.c.l.b16 %v916
      %v1433 = vunpack.c.l.b16 %v917
      %v1434 = vunpack.c.l.b16 %v918
      %v1435 = vunpack.c.l.b16 %v919
      %v1436 = vunpack.c.l.b16 %v920
      %v1437 = vunpack.c.l.b16 %v921
      %v1438 = vunpack.c.l.b16 %v922
      %v1439 = vunpack.c.l.b16 %v923
      %v1440 = vunpack.c.l.b16 %v924
      %v1441 = vunpack.c.l.b16 %v925
      %v1442 = vunpack.c.l.b16 %v926
      %v1443 = vunpack.c.l.b16 %v927
      %v1444 = vunpack.c.l.b16 %v928
      %v1445 = vunpack.c.l.b16 %v929
      %v1446 = vunpack.c.l.b16 %v930
      %v1447 = vunpack.c.l.b16 %v931
      %v1448 = vunpack.c.l.b16 %v932
      %v1449 = vunpack.c.l.b16 %v933
      %v1450 = vunpack.c.l.b16 %v934
      %v1451 = vunpack.c.l.b16 %v935
      %v1452 = vunpack.c.l.b16 %v936
      %v1453 = vunpack.c.l.b16 %v937
      %v1454 = vunpack.c.l.b16 %v938
      %v1455 = vunpack.c.l.b16 %v939
      %v1456 = vunpack.c.l.b16 %v940
      %v1457 = vunpack.c.l.b16 %v941
      %v1458 = vunpack.c.l.b16 %v942
      %v1459 = vunpack.c.l.b16 %v943
      %v1460 = vunpack.c.l.b16 %v944
      %v1461 = vunpack.c.l.b16 %v945
      %v1462 = vunpack.c.l.b16 %v946
      %v1463 = vunpack.c.l.b16 %v947
      %v1464 = vunpack.c.l.b16 %v948
      %v1465 = vunpack.c.l.b16 %v949
      %v1466 = vunpack.c.l.b16 %v950
      %v1467 = vunpack.c.l.b16 %v951
      %v1468 = vunpack.c.l.b16 %v952
      %v1469 = vunpack.c.l.b16 %v953
      %v1470 = vunpack.c.l.b16 %v954
      %v1471 = vunpack.c.l.b16 %v955
      %v1472 = vunpack.c.l.b16 %v956
      %v1473 = vunpack.c.l.b16 %v957
      %v1474 = vunpack.c.l.b16 %v958
      %v1475 = vunpack.c.l.b16 %v959
      %v1476 = vunpack.c.l.b16 %v960
      %v1477 = vunpack.c.l.b16 %v961
      %v1478 = vunpack.c.l.b16 %v962
      %v1479 = vunpack.c.l.b16 %v963
      %v1480 = vunpack.c.l.b16 %v964
      %v1481 = vunpack.c.l.b16 %v965
      %v1482 = vunpack.c.l.b16 %v966
      %v1483 = vunpack.c.l.b16 %v967
      %v1484 = vunpack.c.l.b16 %v968
      %v1485 = vunpack.c.l.b16 %v969
      %v1486 = vunpack.c.l.b16 %v970
      %v1487 = vunpack.c.l.b16 %v971
      %v1488 = vunpack.c.l.b16 %v972
      %v1489 = vunpack.c.l.b16 %v973
      %v1490 = vunpack.c.l.b16 %v974
      %v1491 = vunpack.c.l.b16 %v975
      %v1492 = vunpack.c.l.b16 %v976
      %v1493 = vunpack.c.l.b16 %v977
      %v1494 = vunpack.c.l.b16 %v978
      %v1495 = vunpack.c.l.b16 %v979
      %v1496 = vunpack.c.l.b16 %v980
      %v1497 = vunpack.c.l.b16 %v981
      %v1498 = vunpack.c.l.b16 %v982
      %v1499 = vunpack.c.l.b16 %v983
      %v1500 = vunpack.c.l.b16 %v984
      %v1501 = vunpack.c.l.b16 %v985
      %v1502 = vunpack.c.l.b16 %v986
      %v1503 = vunpack.c.l.b16 %v987
      %v1504 = vunpack.c.l.b16 %v988
      %v1505 = vunpack.c.l.b16 %v989
      %v1506 = vunpack.c.l.b16 %v990
      %v1507 = vunpack.c.l.b16 %v991
      %v1508 = vunpack.c.l.b16 %v992
      %v1509 = vunpack.c.l.b16 %v993
      %v1510 = vunpack.c.l.b16 %v994
      %v1511 = vunpack.c.l.b16 %v995
      %v1512 = vunpack.c.l.b16 %v996
      %v1513 = vunpack.c.l.b16 %v997
      %v1514 = vunpack.c.l.b16 %v998
      %v1515 = vunpack.c.l.b16 %v999
      %v1516 = vunpack.c.l.b16 %v1000
      %v1517 = vunpack.c.l.b16 %v1001
      %v1518 = vunpack.c.l.b16 %v1002
      %v1519 = vunpack.c.l.b16 %v1003
      %v1520 = vunpack.c.l.b16 %v1004
      %v1521 = vunpack.c.l.b16 %v1005
      %v1522 = vunpack.c.l.b16 %v1006
      %v1523 = vunpack.c.l.b16 %v1007
      %v1524 = vunpack.c.l.b16 %v1008
      %v1525 = vunpack.c.l.b16 %v1009
      %v1526 = vunpack.c.l.b16 %v1010
      %v1527 = vunpack.c.l.b16 %v1011
      %v1528 = vunpack.c.l.b16 %v1012
      %v1529 = vunpack.c.l.b16 %v1013
      %v1530 = vunpack.c.l.b16 %v1014
      %v1531 = vunpack.c.l.b16 %v1015
      %v1532 = vunpack.c.l.b16 %v1016
      %v1533 = vunpack.c.l.b16 %v1017
      %v1534 = vunpack.c.l.b16 %v1018
      %v1535 = vunpack.c.l.b16 %v1019
      %v1536 = vunpack.c.l.b16 %v1020
      %v1537 = vunpack.c.l.b16 %v1021
      %v1538 = vunpack.c.l.b16 %v1022
      %v1539 = vunpack.c.l.b16 %v1023
      %v1540 = vunpack.c.l.b16 %v1024
      %v1541 = vunpack.c.l.b16 %v1025
      %v1542 = vunpack.c.l.b16 %v1026
      %v1543 = vunpack.c.l.b16 %v1027
      %v1544 = vunpack.c.l.b16 %v1028
      %v1545 = vunpack.c.l.b16 %v1029
      %v1546 = vunpack.c.l.b16 %v1030
      %v1547 = vunpack.c.l.b16 %v1031
      %v1548 = vunpack.c.l.b16 %v1032
      %v1549 = vunpack.c.l.b16 %v1033
      %v1550 = vunpack.c.l.b16 %v1034
      %v1551 = vunpack.c.l.b16 %v1035
      %v1552 = vunpack.c.l.b16 %v1036
      %v1553 = vunpack.c.l.b16 %v1037
      %v1554 = vunpack.c.l.b16 %v1038
      %v1555 = vunpack.c.l.b16 %v1039
      %v1556 = vunpack.c.l.b16 %v1040
      %v1557 = vunpack.c.l.b16 %v1041
      %v1558 = vunpack.c.l.b16 %v1042
      %v1559 = vunpack.c.l.b16 %v1043
      %v1560 = vunpack.c.l.b16 %v1044
      %v1561 = vunpack.c.l.b16 %v1045
      %v1562 = vunpack.c.l.b16 %v1046
      %v1563 = vunpack.c.l.b16 %v1047
      %v1564 = vunpack.c.l.b16 %v1048
      %v1565 = vunpack.c.l.b16 %v1049
      %v1566 = vunpack.c.l.b16 %v1050
      %v1567 = vunpack.c.l.b16 %v1051
      %v1568 = vunpack.c.l.b16 %v1052
      %v1569 = vunpack.c.l.b16 %v1053
      %v1570 = vunpack.c.l.b16 %v1054
      %v1571 = vunpack.c.l.b16 %v1055
      %v1572 = vunpack.c.l.b16 %v1056
      %v1573 = vunpack.c.l.b16 %v1057
      %v1574 = vunpack.c.l.b16 %v1058
      %v1575 = vunpack.c.l.b16 %v1059
      %v1576 = vunpack.c.l.b16 %v1060
      %v1577 = vunpack.c.l.b16 %v1061
      %v1578 = vunpack.c.l.b16 %v1062
      %v1579 = vunpack.c.l.b16 %v1063
      %v1580 = vunpack.c.l.b16 %v1064
      %v1581 = vunpack.c.l.b16 %v1065
      %v1582 = vunpack.c.l.b16 %v1066
      %v1583 = vunpack.c.l.b16 %v1067
      %v1584 = vunpack.c.l.b16 %v1068
      %v1585 = vunpack.c.l.b16 %v1069
      %v1586 = vunpack.c.l.b16 %v1070
      %v1587 = vunpack.c.l.b16 %v1071
      %v1588 = vunpack.c.l.b16 %v1072
      %v1589 = vunpack.c.l.b16 %v1073
      %v1590 = vunpack.c.l.b16 %v1074
      %v1591 = vunpack.c.l.b16 %v1075
      %v1592 = vunpack.c.l.b16 %v1076
      %v1593 = vunpack.c.l.b16 %v1077
      %v1594 = vunpack.c.l.b16 %v1078
      %v1595 = vunpack.c.l.b16 %v1079
      %v1596 = vunpack.c.l.b16 %v1080
      %v1597 = vunpack.c.l.b16 %v1081
      %v1598 = vunpack.c.l.b16 %v1082
      %v1599 = vunpack.c.l.b16 %v1083
      %v1600 = vunpack.c.l.b16 %v1084
      %v1601 = vunpack.c.l.b16 %v1085
      %v1602 = vunpack.c.l.b16 %v1086
      %v1603 = vunpack.c.l.b16 %v1087
      %v1604 = vunpack.c.l.b16 %v1088
      %v1605 = vunpack.c.l.b16 %v1089
      %v1606 = vunpack.c.l.b16 %v1090
      %v1607 = vunpack.c.l.b16 %v1091
      %v1608 = vunpack.c.l.b16 %v1092
      %v1609 = vunpack.c.l.b16 %v1093
      %v1610 = vunpack.c.l.b16 %v1094
      %v1611 = vunpack.c.l.b16 %v1095
      %v1612 = vunpack.c.l.b16 %v1096
      %v1613 = vunpack.c.l.b16 %v1097
      %v1614 = vunpack.c.l.b16 %v1098
      %v1615 = vunpack.c.l.b16 %v1099
      %v1616 = vunpack.c.l.b16 %v1100
      %v1617 = vunpack.c.l.b16 %v1101
      %v1618 = vunpack.c.l.b16 %v1102
      %v1619 = vunpack.c.l.b16 %v1103
      %v1620 = vunpack.c.l.b16 %v1104
      %v1621 = vunpack.c.l.b16 %v1105
      %v1622 = vunpack.c.l.b16 %v1106
      %v1623 = vunpack.c.l.b16 %v1107
      %v1624 = vunpack.c.l.b16 %v1108
      %v1625 = vunpack.c.l.b16 %v1109
      %v1626 = vunpack.c.l.b16 %v1110
      %v1627 = vunpack.c.l.b16 %v1111
      %v1628 = vunpack.c.l.b16 %v1112
      %v1629 = vunpack.c.l.b16 %v1113
      %v1630 = vunpack.c.l.b16 %v1114
      %v1631 = vunpack.c.l.b16 %v1115
      %v1632 = vunpack.c.l.b16 %v1116
      %v1633 = vunpack.c.l.b16 %v1117
      %v1634 = vunpack.c.l.b16 %v1118
      %v1635 = vunpack.c.l.b16 %v1119
      %v1636 = vunpack.c.l.b16 %v1120
      %v1637 = vunpack.c.l.b16 %v1121
      %v1638 = vunpack.c.l.b16 %v1122
      %v1639 = vunpack.c.l.b16 %v1123
      %v1640 = vunpack.c.l.b16 %v1124
      %v1641 = vunpack.c.l.b16 %v1125
      %v1642 = vunpack.c.l.b16 %v1126
      %v1643 = vunpack.c.l.b16 %v1127
      %v1644 = vunpack.c.l.b16 %v1128
      %v1645 = vunpack.c.l.b16 %v1129
      %v1646 = vunpack.c.l.b16 %v1130
      %v1647 = vunpack.c.l.b16 %v1131
      %v1648 = vunpack.c.l.b16 %v1132
      %v1649 = vunpack.c.l.b16 %v1133
      %v1650 = vunpack.c.l.b16 %v1134
      %v1651 = vunpack.c.l.b16 %v1135
      %v1652 = vunpack.c.l.b16 %v1136
      %v1653 = vunpack.c.l.b16 %v1137
      %v1654 = vunpack.c.l.b16 %v1138
      %v1655 = vunpack.c.l.b16 %v1139
      %v1656 = vunpack.c.l.b16 %v1140
      %v1657 = vunpack.c.l.b16 %v1141
      %v1658 = vunpack.c.l.b16 %v1142
      %v1659 = vunpack.c.l.b16 %v1143
      %v1660 = vunpack.c.l.b16 %v1144
      %v1661 = vunpack.c.l.b16 %v1145
      %v1662 = vunpack.c.l.b16 %v1146
      %v1663 = vunpack.c.l.b16 %v1147
      %v1664 = vunpack.c.l.b16 %v1148
      %v1665 = vunpack.c.l.b16 %v1149
      %v1666 = vunpack.c.l.b16 %v1150
      %v1667 = vunpack.c.l.b16 %v1151
      %v1668 = vunpack.c.l.b16 %v1152
      %v1669 = vunpack.c.l.b16 %v1153
      %v1670 = vunpack.c.l.b16 %v1154
      %v1671 = vunpack.c.l.b16 %v1155
      %v1672 = vunpack.c.l.b16 %v1156
      %v1673 = vunpack.c.l.b16 %v1157
      %v1674 = vunpack.c.l.b16 %v1158
      %v1675 = vpack.c.b16 %v1420, %v1419
      %v1676 = vpack.c.b16 %v1422, %v1421
      %v1677 = vpack.c.b16 %v1424, %v1423
      %v1678 = vpack.c.b16 %v1426, %v1425
      %v1679 = vpack.c.b16 %v1428, %v1427
      %v1680 = vpack.c.b16 %v1430, %v1429
      %v1681 = vpack.c.b16 %v1432, %v1431
      %v1682 = vpack.c.b16 %v1434, %v1433
      %v1683 = vpack.c.b16 %v1436, %v1435
      %v1684 = vpack.c.b16 %v1438, %v1437
      %v1685 = vpack.c.b16 %v1440, %v1439
      %v1686 = vpack.c.b16 %v1442, %v1441
      %v1687 = vpack.c.b16 %v1444, %v1443
      %v1688 = vpack.c.b16 %v1446, %v1445
      %v1689 = vpack.c.b16 %v1448, %v1447
      %v1690 = vpack.c.b16 %v1450, %v1449
      %v1691 = vpack.c.b16 %v1452, %v1451
      %v1692 = vpack.c.b16 %v1454, %v1453
      %v1693 = vpack.c.b16 %v1456, %v1455
      %v1694 = vpack.c.b16 %v1458, %v1457
      %v1695 = vpack.c.b16 %v1460, %v1459
      %v1696 = vpack.c.b16 %v1462, %v1461
      %v1697 = vpack.c.b16 %v1464, %v1463
      %v1698 = vpack.c.b16 %v1466, %v1465
      %v1699 = vpack.c.b16 %v1468, %v1467
      %v1700 = vpack.c.b16 %v1470, %v1469
      %v1701 = vpack.c.b16 %v1472, %v1471
      %v1702 = vpack.c.b16 %v1474, %v1473
      %v1703 = vpack.c.b16 %v1476, %v1475
      %v1704 = vpack.c.b16 %v1478, %v1477
      %v1705 = vpack.c.b16 %v1480, %v1479
      %v1706 = vpack.c.b16 %v1482, %v1481
      %v1707 = vpack.c.b16 %v1484, %v1483
      %v1708 = vpack.c.b16 %v1486, %v1485
      %v1709 = vpack.c.b16 %v1488, %v1487
      %v1710 = vpack.c.b16 %v1490, %v1489
      %v1711 = vpack.c.b16 %v1492, %v1491
      %v1712 = vpack.c.b16 %v1494, %v1493
      %v1713 = vpack.c.b16 %v1496, %v1495
      %v1714 = vpack.c.b16 %v1498, %v1497
      %v1715 = vpack.c.b16 %v1500, %v1499
      %v1716 = vpack.c.b16 %v1502, %v1501
      %v1717 = vpack.c.b16 %v1504, %v1503
      %v1718 = vpack.c.b16 %v1506, %v1505
      %v1719 = vpack.c.b16 %v1508, %v1507
      %v1720 = vpack.c.b16 %v1510, %v1509
      %v1721 = vpack.c.b16 %v1512, %v1511
      %v1722 = vpack.c.b16 %v1514, %v1513
      %v1723 = vpack.c.b16 %v1516, %v1515
      %v1724 = vpack.c.b16 %v1518, %v1517
      %v1725 = vpack.c.b16 %v1520, %v1519
      %v1726 = vpack.c.b16 %v1522, %v1521
      %v1727 = vpack.c.b16 %v1524, %v1523
      %v1728 = vpack.c.b16 %v1526, %v1525
      %v1729 = vpack.c.b16 %v1528, %v1527
      %v1730 = vpack.c.b16 %v1530, %v1529
      %v1731 = vpack.c.b16 %v1532, %v1531
      %v1732 = vpack.c.b16 %v1534, %v1533
      %v1733 = vpack.c.b16 %v1536, %v1535
      %v1734 = vpack.c.b16 %v1538, %v1537
      %v1735 = vpack.c.b16 %v1540, %v1539
      %v1736 = vpack.c.b16 %v1542, %v1541
      %v1737 = vpack.c.b16 %v1544, %v1543
      %v1738 = vpack.c.b16 %v1546, %v1545
      %v1739 = vpack.c.b16 %v1548, %v1547
      %v1740 = vpack.c.b16 %v1550, %v1549
      %v1741 = vpack.c.b16 %v1552, %v1551
      %v1742 = vpack.c.b16 %v1554, %v1553
      %v1743 = vpack.c.b16 %v1556, %v1555
      %v1744 = vpack.c.b16 %v1558, %v1557
      %v1745 = vpack.c.b16 %v1560, %v1559
      %v1746 = vpack.c.b16 %v1562, %v1561
      %v1747 = vpack.c.b16 %v1564, %v1563
      %v1748 = vpack.c.b16 %v1566, %v1565
      %v1749 = vpack.c.b16 %v1568, %v1567
      %v1750 = vpack.c.b16 %v1570, %v1569
      %v1751 = vpack.c.b16 %v1572, %v1571
      %v1752 = vpack.c.b16 %v1574, %v1573
      %v1753 = vpack.c.b16 %v1576, %v1575
      %v1754 = vpack.c.b16 %v1578, %v1577
      %v1755 = vpack.c.b16 %v1580, %v1579
      %v1756 = vpack.c.b16 %v1582, %v1581
      %v1757 = vpack.c.b16 %v1584, %v1583
      %v1758 = vpack.c.b16 %v1586, %v1585
      %v1759 = vpack.c.b16 %v1588, %v1587
      %v1760 = vpack.c.b16 %v1590, %v1589
      %v1761 = vpack.c.b16 %v1592, %v1591
      %v1762 = vpack.c.b16 %v1594, %v1593
      %v1763 = vpack.c.b16 %v1596, %v1595
      %v1764 = vpack.c.b16 %v1598, %v1597
      %v1765 = vpack.c.b16 %v1600, %v1599
      %v1766 = vpack.c.b16 %v1602, %v1601
      %v1767 = vpack.c.b16 %v1604, %v1603
      %v1768 = vpack.c.b16 %v1606, %v1605
      %v1769 = vpack.c.b16 %v1608, %v1607
      %v1770 = vpack.c.b16 %v1610, %v1609
      %v1771 = vpack.c.b16 %v1612, %v1611
      %v1772 = vpack.c.b16 %v1614, %v1613
      %v1773 = vpack.c.b16 %v1616, %v1615
      %v1774 = vpack.c.b16 %v1618, %v1617
      %v1775 = vpack.c.b16 %v1620, %v1619
      %v1776 = vpack.c.b16 %v1622, %v1621
      %v1777 = vpack.c.b16 %v1624, %v1623
      %v1778 = vpack.c.b16 %v1626, %v1625
      %v1779 = vpack.c.b16 %v1628, %v1627
      %v1780 = vpack.c.b16 %v1630, %v1629
      %v1781 = vpack.c.b16 %v1632, %v1631
      %v1782 = vpack.c.b16 %v1634, %v1633
      %v1783 = vpack.c.b16 %v1636, %v1635
      %v1784 = vpack.c.b16 %v1638, %v1637
      %v1785 = vpack.c.b16 %v1640, %v1639
      %v1786 = vpack.c.b16 %v1642, %v1641
      %v1787 = vpack.c.b16 %v1644, %v1643
      %v1788 = vpack.c.b16 %v1646, %v1645
      %v1789 = vpack.c.b16 %v1648, %v1647
      %v1790 = vpack.c.b16 %v1650, %v1649
      %v1791 = vpack.c.b16 %v1652, %v1651
      %v1792 = vpack.c.b16 %v1654, %v1653
      %v1793 = vpack.c.b16 %v1656, %v1655
      %v1794 = vpack.c.b16 %v1658, %v1657
      %v1795 = vpack.c.b16 %v1660, %v1659
      %v1796 = vpack.c.b16 %v1662, %v1661
      %v1797 = vpack.c.b16 %v1664, %v1663
      %v1798 = vpack.c.b16 %v1666, %v1665
      %v1799 = vpack.c.b16 %v1668, %v1667
      %v1800 = vpack.c.b16 %v1670, %v1669
      %v1801 = vpack.c.b16 %v1672, %v1671
      %v1802 = vpack.c.b16 %v1674, %v1673
      %1931 = vmatpush.bf16.msra.mxu0 %v1682
      %1932 = vmatpush.bf16.msra.mxu0 %v1681
      %1933 = vmatpush.bf16.msra.mxu0 %v1680
      %1934 = vmatpush.bf16.msra.mxu0 %v1679
      %1935 = vmatpush.bf16.msra.mxu0 %v1678
      %1936 = vmatpush.bf16.msra.mxu0 %v1677
      %1937 = vmatpush.bf16.msra.mxu0 %v1676
      %1938 = vmatpush.bf16.msra.mxu0 %v1675
      %1939 = vmatmul.bf16.gmra.mxu0 %v887
      %v1940 = vpop.f32.mrf.mxu0
      %v1941 = vadd.f32 %v1161, %v1940
      %v1942 = vpop.f32.mrf.mxu0
      %1943 = vdwg.mxu0
      %1944 = vmatpush.bf16.msra.mxu0 %v1690
      %1945 = vmatpush.bf16.msra.mxu0 %v1689
      %1946 = vmatpush.bf16.msra.mxu0 %v1688
      %1947 = vmatpush.bf16.msra.mxu0 %v1687
      %1948 = vmatpush.bf16.msra.mxu0 %v1686
      %1949 = vmatpush.bf16.msra.mxu0 %v1685
      %1950 = vmatpush.bf16.msra.mxu0 %v1684
      %1951 = vmatpush.bf16.msra.mxu0 %v1683
      %1952 = vmatmul.bf16.gmra.mxu0 %v888
      %v1953 = vpop.f32.mrf.mxu0
      %v1954 = vadd.f32 %v1941, %v1953
      %v1955 = vpop.f32.mrf.mxu0
      %1956 = vdwg.mxu0
      %1957 = vmatpush.bf16.msra.mxu0 %v1698
      %1958 = vmatpush.bf16.msra.mxu0 %v1697
      %1959 = vmatpush.bf16.msra.mxu0 %v1696
      %1960 = vmatpush.bf16.msra.mxu0 %v1695
      %1961 = vmatpush.bf16.msra.mxu0 %v1694
      %1962 = vmatpush.bf16.msra.mxu0 %v1693
      %1963 = vmatpush.bf16.msra.mxu0 %v1692
      %1964 = vmatpush.bf16.msra.mxu0 %v1691
      %1965 = vmatmul.bf16.gmra.mxu0 %v889
      %v1966 = vpop.f32.mrf.mxu0
      %v1967 = vadd.f32 %v1954, %v1966
      %v1968 = vpop.f32.mrf.mxu0
      %1969 = vdwg.mxu0
      %1970 = vmatpush.bf16.msra.mxu0 %v1706
      %1971 = vmatpush.bf16.msra.mxu0 %v1705
      %1972 = vmatpush.bf16.msra.mxu0 %v1704
      %1973 = vmatpush.bf16.msra.mxu0 %v1703
      %1974 = vmatpush.bf16.msra.mxu0 %v1702
      %1975 = vmatpush.bf16.msra.mxu0 %v1701
      %1976 = vmatpush.bf16.msra.mxu0 %v1700
      %1977 = vmatpush.bf16.msra.mxu0 %v1699
      %1978 = vmatmul.bf16.gmra.mxu0 %v890
      %v1979 = vpop.f32.mrf.mxu0
      %v1980 = vadd.f32 %v1967, %v1979
      %v1981 = vpop.f32.mrf.mxu0
      %1982 = vdwg.mxu0
      %1983 = vmatpush.bf16.msra.mxu0 %v1714
      %1984 = vmatpush.bf16.msra.mxu0 %v1713
      %1985 = vmatpush.bf16.msra.mxu0 %v1712
      %1986 = vmatpush.bf16.msra.mxu0 %v1711
      %1987 = vmatpush.bf16.msra.mxu0 %v1710
      %1988 = vmatpush.bf16.msra.mxu0 %v1709
      %1989 = vmatpush.bf16.msra.mxu0 %v1708
      %1990 = vmatpush.bf16.msra.mxu0 %v1707
      %1991 = vmatmul.bf16.gmra.mxu0 %v891
      %v1992 = vpop.f32.mrf.mxu0
      %v1993 = vadd.f32 %v1980, %v1992
      %v1994 = vpop.f32.mrf.mxu0
      %1995 = vdwg.mxu0
      %1996 = vmatpush.bf16.msra.mxu0 %v1722
      %1997 = vmatpush.bf16.msra.mxu0 %v1721
      %1998 = vmatpush.bf16.msra.mxu0 %v1720
      %1999 = vmatpush.bf16.msra.mxu0 %v1719
      %2000 = vmatpush.bf16.msra.mxu0 %v1718
      %2001 = vmatpush.bf16.msra.mxu0 %v1717
      %2002 = vmatpush.bf16.msra.mxu0 %v1716
      %2003 = vmatpush.bf16.msra.mxu0 %v1715
      %2004 = vmatmul.bf16.gmra.mxu0 %v892
      %v2005 = vpop.f32.mrf.mxu0
      %v2006 = vadd.f32 %v1993, %v2005
      %v2007 = vpop.f32.mrf.mxu0
      %2008 = vdwg.mxu0
      %2009 = vmatpush.bf16.msra.mxu0 %v1730
      %2010 = vmatpush.bf16.msra.mxu0 %v1729
      %2011 = vmatpush.bf16.msra.mxu0 %v1728
      %2012 = vmatpush.bf16.msra.mxu0 %v1727
      %2013 = vmatpush.bf16.msra.mxu0 %v1726
      %2014 = vmatpush.bf16.msra.mxu0 %v1725
      %2015 = vmatpush.bf16.msra.mxu0 %v1724
      %2016 = vmatpush.bf16.msra.mxu0 %v1723
      %2017 = vmatmul.bf16.gmra.mxu0 %v893
      %v2018 = vpop.f32.mrf.mxu0
      %v2019 = vadd.f32 %v2006, %v2018
      %v2020 = vpop.f32.mrf.mxu0
      %2021 = vdwg.mxu0
      %2022 = vmatpush.bf16.msra.mxu0 %v1738
      %2023 = vmatpush.bf16.msra.mxu0 %v1737
      %2024 = vmatpush.bf16.msra.mxu0 %v1736
      %2025 = vmatpush.bf16.msra.mxu0 %v1735
      %2026 = vmatpush.bf16.msra.mxu0 %v1734
      %2027 = vmatpush.bf16.msra.mxu0 %v1733
      %2028 = vmatpush.bf16.msra.mxu0 %v1732
      %2029 = vmatpush.bf16.msra.mxu0 %v1731
      %2030 = vmatmul.bf16.gmra.mxu0 %v894
      %v2031 = vpop.f32.mrf.mxu0
      %v2032 = vadd.f32 %v2019, %v2031
      %v2033 = vpop.f32.mrf.mxu0
      %2034 = vdwg.mxu0
      %2035 = vmatpush.bf16.msra.mxu0 %v1746
      %2036 = vmatpush.bf16.msra.mxu0 %v1745
      %2037 = vmatpush.bf16.msra.mxu0 %v1744
      %2038 = vmatpush.bf16.msra.mxu0 %v1743
      %2039 = vmatpush.bf16.msra.mxu0 %v1742
      %2040 = vmatpush.bf16.msra.mxu0 %v1741
      %2041 = vmatpush.bf16.msra.mxu0 %v1740
      %2042 = vmatpush.bf16.msra.mxu0 %v1739
      %2043 = vmatmul.bf16.gmra.mxu0 %v895
      %v2044 = vpop.f32.mrf.mxu0
      %v2045 = vadd.f32 %v2032, %v2044
      %v2046 = vpop.f32.mrf.mxu0
      %2047 = vdwg.mxu0
      %2048 = vmatpush.bf16.msra.mxu0 %v1754
      %2049 = vmatpush.bf16.msra.mxu0 %v1753
      %2050 = vmatpush.bf16.msra.mxu0 %v1752
      %2051 = vmatpush.bf16.msra.mxu0 %v1751
      %2052 = vmatpush.bf16.msra.mxu0 %v1750
      %2053 = vmatpush.bf16.msra.mxu0 %v1749
      %2054 = vmatpush.bf16.msra.mxu0 %v1748
      %2055 = vmatpush.bf16.msra.mxu0 %v1747
      %2056 = vmatmul.bf16.gmra.mxu0 %v896
      %v2057 = vpop.f32.mrf.mxu0
      %v2058 = vadd.f32 %v2045, %v2057
      %v2059 = vpop.f32.mrf.mxu0
      %2060 = vdwg.mxu0
      %2061 = vmatpush.bf16.msra.mxu0 %v1762
      %2062 = vmatpush.bf16.msra.mxu0 %v1761
      %2063 = vmatpush.bf16.msra.mxu0 %v1760
      %2064 = vmatpush.bf16.msra.mxu0 %v1759
      %2065 = vmatpush.bf16.msra.mxu0 %v1758
      %2066 = vmatpush.bf16.msra.mxu0 %v1757
      %2067 = vmatpush.bf16.msra.mxu0 %v1756
      %2068 = vmatpush.bf16.msra.mxu0 %v1755
      %2069 = vmatmul.bf16.gmra.mxu0 %v897
      %v2070 = vpop.f32.mrf.mxu0
      %v2071 = vadd.f32 %v2058, %v2070
      %v2072 = vpop.f32.mrf.mxu0
      %2073 = vdwg.mxu0
      %2074 = vmatpush.bf16.msra.mxu0 %v1770
      %2075 = vmatpush.bf16.msra.mxu0 %v1769
      %2076 = vmatpush.bf16.msra.mxu0 %v1768
      %2077 = vmatpush.bf16.msra.mxu0 %v1767
      %2078 = vmatpush.bf16.msra.mxu0 %v1766
      %2079 = vmatpush.bf16.msra.mxu0 %v1765
      %2080 = vmatpush.bf16.msra.mxu0 %v1764
      %2081 = vmatpush.bf16.msra.mxu0 %v1763
      %2082 = vmatmul.bf16.gmra.mxu0 %v898
      %v2083 = vpop.f32.mrf.mxu0
      %v2084 = vadd.f32 %v2071, %v2083
      %v2085 = vpop.f32.mrf.mxu0
      %2086 = vdwg.mxu0
      %2087 = vmatpush.bf16.msra.mxu0 %v1778
      %2088 = vmatpush.bf16.msra.mxu0 %v1777
      %2089 = vmatpush.bf16.msra.mxu0 %v1776
      %2090 = vmatpush.bf16.msra.mxu0 %v1775
      %2091 = vmatpush.bf16.msra.mxu0 %v1774
      %2092 = vmatpush.bf16.msra.mxu0 %v1773
      %2093 = vmatpush.bf16.msra.mxu0 %v1772
      %2094 = vmatpush.bf16.msra.mxu0 %v1771
      %2095 = vmatmul.bf16.gmra.mxu0 %v899
      %v2096 = vpop.f32.mrf.mxu0
      %v2097 = vadd.f32 %v2084, %v2096
      %v2098 = vpop.f32.mrf.mxu0
      %2099 = vdwg.mxu0
      %2100 = vmatpush.bf16.msra.mxu0 %v1786
      %2101 = vmatpush.bf16.msra.mxu0 %v1785
      %2102 = vmatpush.bf16.msra.mxu0 %v1784
      %2103 = vmatpush.bf16.msra.mxu0 %v1783
      %2104 = vmatpush.bf16.msra.mxu0 %v1782
      %2105 = vmatpush.bf16.msra.mxu0 %v1781
      %2106 = vmatpush.bf16.msra.mxu0 %v1780
      %2107 = vmatpush.bf16.msra.mxu0 %v1779
      %2108 = vmatmul.bf16.gmra.mxu0 %v900
      %v2109 = vpop.f32.mrf.mxu0
      %v2110 = vadd.f32 %v2097, %v2109
      %v2111 = vpop.f32.mrf.mxu0
      %2112 = vdwg.mxu0
      %2113 = vmatpush.bf16.msra.mxu0 %v1794
      %2114 = vmatpush.bf16.msra.mxu0 %v1793
      %2115 = vmatpush.bf16.msra.mxu0 %v1792
      %2116 = vmatpush.bf16.msra.mxu0 %v1791
      %2117 = vmatpush.bf16.msra.mxu0 %v1790
      %2118 = vmatpush.bf16.msra.mxu0 %v1789
      %2119 = vmatpush.bf16.msra.mxu0 %v1788
      %2120 = vmatpush.bf16.msra.mxu0 %v1787
      %2121 = vmatmul.bf16.gmra.mxu0 %v901
      %v2122 = vpop.f32.mrf.mxu0
      %v2123 = vadd.f32 %v2110, %v2122
      %v2124 = vpop.f32.mrf.mxu0
      %2125 = vdwg.mxu0
      %2126 = vmatpush.bf16.msra.mxu0 %v1802
      %2127 = vmatpush.bf16.msra.mxu0 %v1801
      %2128 = vmatpush.bf16.msra.mxu0 %v1800
      %2129 = vmatpush.bf16.msra.mxu0 %v1799
      %2130 = vmatpush.bf16.msra.mxu0 %v1798
      %2131 = vmatpush.bf16.msra.mxu0 %v1797
      %2132 = vmatpush.bf16.msra.mxu0 %v1796
      %2133 = vmatpush.bf16.msra.mxu0 %v1795
      %2134 = vmatmul.bf16.gmra.mxu0 %v902
      %v2135 = vpop.f32.mrf.mxu0
      %v2136 = vadd.f32 %v2123, %v2135
      %v2137 = vpop.f32.mrf.mxu0
      %2138 = vdwg.mxu0
      %v2139 = vmax.f32 %v2136, 0.0
      %v2140 = vld [vmem:[%s7] sm:$0x1]
      %v2142 = vperm.slane %v2140, 0
      %v2144 = vmul.f32 %v2139, %v2142
      %vm2145 = vcmask 517120
      %v2146 = vsel %vm2145, %v2144, 0.0
      %2147 = vadd.xlane.f32.xlu0 %v2146
      %v2148 = vpop.xlane.xlu0 %2147
      %v2149 = vld [vmem:[#allocation2] sm:$0x1]
      %v2151 = vperm.slane %v2149, 0
      %v2153 = vadd.f32 %v2148, %v2151
      %vm2154 = vcmask 1024
      %2155 = vst.msk [vmem:[%s332] sm:$0x3] %vm2154, %v2153
      %p2156 = scmp.lt.s32.totalorder %s22, 7
      %s2157 = scalar_select %p2156, %s22, 7
      %s2158 = smul.addr %s2157, 2
      %s2159 = scalar_lea.vmem %s9, %s2158
      // Predicated region
      $region57: #{cnn_forward.1} parent=55 // pred_check
        %p2160 = pneg %p234
      $region58: #{cnn_forward.1} parent=55 // pred_check_branch
        %2162 = sbr.rel (%p2160) target = $region60
      $region59: #{cnn_forward.1} parent=55 // pred_region
        _
      $region60: #{cnn_forward.1} parent=55 // pred_fallthru
        _
    $region56: #{cnn_forward.1} parent=5 // pred_fallthru
      _
    %p2163 = scmp.le.s32.totalorder 2, %s17
    // Predicated region
    $region61: #{cnn_forward.1} parent=5 // pred_check
      %p2164 = pneg %p2163
    $region62: #{cnn_forward.1} parent=5 // pred_check_branch
      %2166 = sbr.rel (%p2164) target = $region64
    $region63: #{cnn_forward.1} parent=5 // pred_region
      %s2167 = ssub.s32 %s17, 2
      // Predicated region
      $region65: #{cnn_forward.1} parent=63 // pred_check
        %p2168 = pneg %p240
      $region66: #{cnn_forward.1} parent=63 // pred_check_branch
        %2170 = sbr.rel (%p2168) target = $region68
      $region67: #{cnn_forward.1} parent=63 // pred_region
        %p2171 = scmp.lt.s32.totalorder %s23, 7
        %s2172 = scalar_select %p2171, %s23, 7
        %s2173 = smul.addr %s2172, 2
        %s2174 = scalar_lea.vmem %s9, %s2173
      $region68: #{cnn_forward.1} parent=63 // pred_fallthru
        _
    $region64: #{cnn_forward.1} parent=5 // pred_fallthru
      _
  $region6: #{cnn_forward.1} parent=0 // loop_footer
    %s21 = sadd.s32 1, %s17
  $region7: #{cnn_forward.1} parent=0 // loop_footer_branch
    %16 = sbr.rel target = $region3
  $region8: #{cnn_forward.1} parent=0 // loop_exit
    _

</llo_original>
